<compile_context>
chip_gen: v7x
topology: tpu7x:2x2x1
jax: 0.10.0
libtpu: 0.0.40
codegen_flags: <defaults>
</compile_context>

<pallas_src>
import functools

import jax
import jax.numpy as jnp
from jax.experimental import pallas as pl
from jax.experimental.pallas import tpu as pltpu

_SQRT_HALF = 0.7071067811865476


def _gelu_linear_kernel(x_ref, w_ref, b_ref, o_ref, acc_ref):
    """One (N-tile, K-tile) grid step of GELU(x) @ W^T + b.

    x_ref:   (M, tk)  f32 input K-slab
    w_ref:   (tn, tk) weight tile in PyTorch (N, K) layout (f32 or bf16)
    b_ref:   (1, tn)  f32 bias tile
    o_ref:   (M, tn)  output tile (written only on the last K step)
    acc_ref: (M, tn)  f32 accumulator scratch
    """
    k = pl.program_id(1)

    @pl.when(k == 0)
    def _():
        # Fold the bias into the accumulator init (saves a separate add pass).
        acc_ref[...] = jnp.broadcast_to(
            b_ref[...].astype(jnp.float32), acc_ref.shape)

    x = x_ref[...]
    # Exact erf-based GELU, matching torch.nn.GELU(approximate='none').
    g = 0.5 * x * (1.0 + jax.lax.erf(x * _SQRT_HALF))

    w = w_ref[...]
    # Match matmul input dtype to the (possibly pre-cast bf16) weight; keep
    # f32 accumulation on the MXU either way.
    g = g.astype(w.dtype)

    # Contract on K (last dim of both operands): no transpose of the weight.
    acc_ref[...] += jax.lax.dot_general(
        g, w,
        dimension_numbers=(((1,), (1,)), ((), ())),
        preferred_element_type=jnp.float32,
    )

    @pl.when(k == pl.num_programs(1) - 1)
    def _():
        o_ref[...] = acc_ref[...].astype(o_ref.dtype)


def _device_kind():
    try:
        return jax.devices()[0].device_kind.lower()
    except Exception:
        return ""


def _pick_tn(n):
    """N-tile: split across the two TensorCores on v7x; single tile otherwise."""
    if "v7" in _device_kind() and n % 256 == 0:
        return n // 2
    return n


def _default_use_bf16():
    """bf16 MXU inputs by default on v5e (f32 matmul there is ~4-6x slower)."""
    return "v5" in _device_kind()


@functools.partial(jax.jit, static_argnames=("tn", "tk"))
def _gelu_linear_2d(x2d, weight, bias, *, tn, tk):
    M, K = x2d.shape
    N = weight.shape[0]
    b2d = bias.reshape(1, N).astype(jnp.float32)

    w_bytes = jnp.dtype(weight.dtype).itemsize
    cost = pl.CostEstimate(
        flops=2 * M * K * N,
        transcendentals=M * K,
        bytes_accessed=4 * (M * K + N + M * N) + w_bytes * N * K,
    )

    return pl.pallas_call(
        _gelu_linear_kernel,
        out_shape=jax.ShapeDtypeStruct((M, N), x2d.dtype),
        grid_spec=pltpu.PrefetchScalarGridSpec(
            num_scalar_prefetch=0,
            grid=(N // tn, K // tk),
            in_specs=[
                pl.BlockSpec((M, tk), lambda j, k: (0, k)),    # input K-slab
                pl.BlockSpec((tn, tk), lambda j, k: (j, k)),   # (N,K)-layout weight
                pl.BlockSpec((1, tn), lambda j, k: (0, j)),    # bias tile
            ],
            out_specs=pl.BlockSpec((M, tn), lambda j, k: (0, j)),
            scratch_shapes=[pltpu.VMEM((M, tn), jnp.float32)],
        ),
        compiler_params=pltpu.CompilerParams(
            dimension_semantics=("parallel", "arbitrary"),
            vmem_limit_bytes=32 * 1024 * 1024,
        ),
        cost_estimate=cost,
    )(x2d, weight, b2d)


def gelu_dropout_linear_dropout(x, weight, bias, *, tn=None, tk=512,
                                use_bf16=None):
    """GELU(exact) -> Dropout(p=0, identity) -> Linear(K->N, bias) -> Dropout(p=0).

    x: (B, H, W, K) float32; weight: (N, K) [PyTorch layout]; bias: (N,).
    """
    B, H, W, K = x.shape
    N = weight.shape[0]
    if tn is None:
        tn = _pick_tn(N)
    if use_bf16 is None:
        use_bf16 = _default_use_bf16()
    if K % tk != 0:
        tk = K  # fall back to a single K step for odd K
    # Pre-cast the weight in HBM (not in-kernel): halves the dominant
    # weight DMA stream on this memory-bound problem. Accumulation stays f32.
    w = weight.astype(jnp.bfloat16) if use_bf16 else weight
    out2d = _gelu_linear_2d(x.reshape(B * H * W, K), w, bias, tn=tn, tk=tk)
    return out2d.reshape(B, H, W, N)


def _reference(x, weight, bias):
    g = 0.5 * x * (1.0 + jax.lax.erf(x / jnp.sqrt(2.0)))
    return jnp.einsum("bhwk,nk->bhwn", g, weight) + bias


if __name__ == "__main__":
    key = jax.random.PRNGKey(0)
    k_x, k_w, k_b = jax.random.split(key, 3)

    # Shapes implied by the module: x [1,14,14,2048], Linear(2048 -> 512).
    B, H, W, K, N = 1, 14, 14, 2048, 512

    x = jax.random.normal(k_x, (B, H, W, K), dtype=jnp.float32)
    weight = jax.random.normal(k_w, (N, K), dtype=jnp.float32) * 0.02
    bias = jax.random.normal(k_b, (N,), dtype=jnp.float32) * 0.02

    use_bf16 = _default_use_bf16()
    out = gelu_dropout_linear_dropout(x, weight, bias, use_bf16=use_bf16)
    out = jax.block_until_ready(out)

    ref = _reference(x, weight, bias)
    assert out.shape == (B, H, W, N), out.shape
    tol = 2e-2 if use_bf16 else 2e-3
    assert jnp.allclose(out, ref, atol=tol, rtol=tol), float(
        jnp.max(jnp.abs(out - ref))
    )

    print("KERNEL_OK")
</pallas_src>

<mosaic_0001>
module attributes {stable_mosaic.version = 11 : i64} {
  func.func @_gelu_linear_kernel(%arg0: i32, %arg1: i32, %arg2: memref<196x512xf32, #tpu.memory_space<vmem>>, %arg3: memref<512x512xf32, #tpu.memory_space<vmem>>, %arg4: memref<1x512xf32, #tpu.memory_space<vmem>>, %arg5: memref<196x512xf32, #tpu.memory_space<vmem>>, %arg6: memref<196x512xf32, #tpu.memory_space<vmem>>) attributes {dimension_semantics = [#tpu.dimension_semantics<parallel>, #tpu.dimension_semantics<arbitrary>], iteration_bounds = array<i64: 1, 4>, scalar_prefetch = 0 : i64, scratch_operands = 1 : i64, tpu.core_type = #tpu.core_type<tc>, window_params = [{transform_indices = @transform_0, window_bounds = array<i64: 196, 512>}, {transform_indices = @transform_1, window_bounds = array<i64: 512, 512>}, {transform_indices = @transform_2, window_bounds = array<i64: 1, 512>}, {transform_indices = @transform_3, window_bounds = array<i64: 196, 512>}]} {
    %c0_i32 = arith.constant 0 : i32
    %0 = arith.cmpi eq, %arg1, %c0_i32 : i32
    %1 = arith.extui %0 : i1 to i32
    %c0_i32_0 = arith.constant 0 : i32
    %2 = arith.cmpi ne, %1, %c0_i32_0 : i32
    scf.if %2 {
      %c0_12 = arith.constant 0 : index
      %c0_13 = arith.constant 0 : index
      %20 = vector.load %arg4[%c0_12, %c0_13] : memref<1x512xf32, #tpu.memory_space<vmem>>, vector<1x512xf32>
      %21 = vector.shape_cast %20 : vector<1x512xf32> to vector<1x512xf32>
      %22 = vector.broadcast %21 : vector<1x512xf32> to vector<196x512xf32>
      %c0_14 = arith.constant 0 : index
      %c0_15 = arith.constant 0 : index
      %23 = vector.load %arg6[%c0_14, %c0_15] : memref<196x512xf32, #tpu.memory_space<vmem>>, vector<196x512xf32>
      tpu.vector_store %arg6[%c0_14, %c0_15], %22 {strides = array<i32>} : memref<196x512xf32, #tpu.memory_space<vmem>>, vector<196x512xf32>,
    } else {
    }
    %c0 = arith.constant 0 : index
    %c0_1 = arith.constant 0 : index
    %3 = vector.load %arg2[%c0, %c0_1] : memref<196x512xf32, #tpu.memory_space<vmem>>, vector<196x512xf32>
    %cst = arith.constant 5.000000e-01 : f32
    %4 = vector.broadcast %cst : f32 to vector<196x512xf32>
    %5 = arith.mulf %4, %3 : vector<196x512xf32>
    %cst_2 = arith.constant 0.707106769 : f32
    %6 = vector.broadcast %cst_2 : f32 to vector<196x512xf32>
    %7 = arith.mulf %3, %6 : vector<196x512xf32>
    %8 = math.erf %7 : vector<196x512xf32>
    %cst_3 = arith.constant 1.000000e+00 : f32
    %9 = vector.broadcast %cst_3 : f32 to vector<196x512xf32>
    %10 = arith.addf %9, %8 : vector<196x512xf32>
    %11 = arith.mulf %5, %10 : vector<196x512xf32>
    %c0_4 = arith.constant 0 : index
    %c0_5 = arith.constant 0 : index
    %12 = vector.load %arg3[%c0_4, %c0_5] : memref<512x512xf32, #tpu.memory_space<vmem>>, vector<512x512xf32>
    %c0_6 = arith.constant 0 : index
    %c0_7 = arith.constant 0 : index
    %13 = vector.load %arg6[%c0_6, %c0_7] : memref<196x512xf32, #tpu.memory_space<vmem>>, vector<196x512xf32>
    %cst_8 = arith.constant dense<0.000000e+00> : vector<196x512xf32>
    %14 = tpu.matmul %11, %12, %cst_8 {dimension_numbers = #tpu.dot_dimension_numbers<[1], [1], [0], [0], [0, 0, 1, 0], [], []>} : vector<196x512xf32>, vector<512x512xf32>, vector<196x512xf32> -> vector<196x512xf32>
    %15 = arith.addf %13, %14 : vector<196x512xf32>
    %c0_9 = arith.constant 0 : index
    %c0_10 = arith.constant 0 : index
    %16 = vector.load %arg6[%c0_9, %c0_10] : memref<196x512xf32, #tpu.memory_space<vmem>>, vector<196x512xf32>
    tpu.vector_store %arg6[%c0_9, %c0_10], %15 {strides = array<i32>} : memref<196x512xf32, #tpu.memory_space<vmem>>, vector<196x512xf32>,
    %c3_i32 = arith.constant 3 : i32
    %17 = arith.cmpi eq, %arg1, %c3_i32 : i32
    %18 = arith.extui %17 : i1 to i32
    %c0_i32_11 = arith.constant 0 : i32
    %19 = arith.cmpi ne, %18, %c0_i32_11 : i32
    scf.if %19 {
      %c0_12 = arith.constant 0 : index
      %c0_13 = arith.constant 0 : index
      %20 = vector.load %arg6[%c0_12, %c0_13] : memref<196x512xf32, #tpu.memory_space<vmem>>, vector<196x512xf32>
      %c0_14 = arith.constant 0 : index
      %c0_15 = arith.constant 0 : index
      %21 = vector.load %arg5[%c0_14, %c0_15] : memref<196x512xf32, #tpu.memory_space<vmem>>, vector<196x512xf32>
      tpu.vector_store %arg5[%c0_14, %c0_15], %20 {strides = array<i32>} : memref<196x512xf32, #tpu.memory_space<vmem>>, vector<196x512xf32>,
    } else {
    }
    return
  }
  func.func @transform_0(%arg0: i32, %arg1: i32) -> (i32, i32) {
    %c0_i32 = arith.constant 0 : i32
    %c0_i32_0 = arith.constant 0 : i32
    return %c0_i32, %arg1 : i32, i32
  }
  func.func @transform_1(%arg0: i32, %arg1: i32) -> (i32, i32) {
    %c0_i32 = arith.constant 0 : i32
    return %arg0, %arg1 : i32, i32
  }
  func.func @transform_2(%arg0: i32, %arg1: i32) -> (i32, i32) {
    %c0_i32 = arith.constant 0 : i32
    %c0_i32_0 = arith.constant 0 : i32
    return %c0_i32, %arg0 : i32, i32
  }
  func.func @transform_3(%arg0: i32, %arg1: i32) -> (i32, i32) {
    %c0_i32 = arith.constant 0 : i32
    %c0_i32_0 = arith.constant 0 : i32
    return %c0_i32, %arg0 : i32, i32
  }
}

</mosaic_0001>

<llo_original>
// kernel: _gelu_linear_2d.1
$region0: #{_gelu_linear_2d.1}
  #allocation0 [shape = 'u32[]', space=smem, size = 0x4, offset = 0x4, fixed_abs, tag = 'smem constant byte address 0x4 - core index']
  #allocation1 [shape = 'u32[144,128]{1,0:T(1,128)}', space=vmem, size = 0x12000, scoped, tag = 'internal scratch']
  #allocation2 [shape = 'f32[196,512]{1,0:T(8,128)}', space=vmem, size = 0x64000, scoped, tag = 'scratch operand']
  %s0 = inlined_call_operand.hbm [shape: f32[196,2048], index: 0, kind: input, shape index: {}]
  %s1 = inlined_call_operand.hbm [shape: f32[512,2048], index: 1, kind: input, shape index: {}]
  %s2 = inlined_call_operand.hbm [shape: f32[1,512], index: 2, kind: input, shape index: {}]
  %s3 = inlined_call_operand.hbm [shape: f32[196,512], index: 3, kind: output, shape index: {}]
  %s4 = sld [smem:[#allocation0]]
  $region65: #{_gelu_linear_2d.1} parent=0
    _
  %s6 = ssub.s32 1, %s4
  %s7 = scalar_select 0, %s6, %s4
  $region1: #{_gelu_linear_2d.1} parent=0
    #allocation3 [shape = 'u8[819200]{0}', space=vmem, size = 0xc8000, scoped, tag = 'input window, operand 0']
    #allocation4 [shape = 's32[2]{0}', space=sflag, size = 0x8, scoped, tag = 'scoped memory for _gelu_linear_2d.1']
    #allocation5 [shape = 's32[2]{0}', space=sflag, size = 0x8, scoped, tag = 'scoped memory for _gelu_linear_2d.1']
    #allocation6 [shape = 'u8[2097152]{0}', space=vmem, size = 0x200000, scoped, tag = 'input window, operand 1']
    #allocation7 [shape = 's32[2]{0}', space=sflag, size = 0x8, scoped, tag = 'scoped memory for _gelu_linear_2d.1']
    #allocation8 [shape = 'u8[2048]{0}', space=vmem, size = 0x800, scoped, tag = 'input window, operand 2, single buffered']
    #allocation9 [shape = 'u8[409600]{0}', space=vmem, size = 0x64000, scoped, tag = 'output window, operand 0, single buffered']
    %8 = vsyncpa [#allocation4], 0
    %s9 = scalar_lea.sflag [#allocation4], 1
    %10 = vsyncpa %s9, 0
    %11 = vsyncpa [#allocation7], 0
    %s12 = scalar_lea.sflag [#allocation7], 1
    %13 = vsyncpa %s12, 0
    %14 = vsyncpa [#allocation5], 0
    loop: start=0, step=1, limit=6
    $region2: #{_gelu_linear_2d.1} parent=1 // loop_pre_header
      _
    $region3: #{_gelu_linear_2d.1} parent=1 // loop_header
      %s16 = sphi 0, %s20
      %p17 = scmp.ge.s32.totalorder %s16, 6
      %s23 = sphi 0, %s35
      %s24 = sphi 0, %s31
      %s25 = sphi 0, %s23
      %s26 = sphi 0, %s24
      %s27 = sphi 0, %s25
      %s28 = sphi 0, %s26
      %s38 = sphi 0, %s40
      %s41 = sphi 0, %s38
      %s42 = sphi 0, %s41
      %s58 = sphi 0, %s42
      %s66 = sphi 0, %s68
      %s69 = sphi 0, %s66
      %s70 = sphi 0, %s69
      %s86 = sphi 0, %s70
      %s92 = sphi 0, %s94
      %s95 = sphi 0, %s92
      %s96 = sphi 0, %s95
      %s112 = sphi 0, %s96
      %s118 = sphi 0, %s120
      %s121 = sphi 0, %s118
      %s122 = sphi 0, %s121
      %s138 = sphi 0, %s122
    $region4: #{_gelu_linear_2d.1} parent=1 // loop_header_branch
      %19 = sbr.rel (%p17) target = $region8
    $region5: #{_gelu_linear_2d.1} parent=1 // loop_body
      %s21 = ssub.s32 %s16, 1
      %s22 = ssub.s32 %s16, 2
      %s29 = sadd.s32 1, %s24
      %p30 = scmp.ge.s32.totalorder %s29, 4
      %s31 = scalar_select %p30, 0, %s29
      %s32 = sadd.s32 1, %s23
      %s33 = scalar_select %p30, %s32, %s23
      %p34 = scmp.ge.s32.totalorder %s33, 1
      %s35 = scalar_select %p34, 0, %s33
      %s36 = ssub.s32 %s24, %s31
      %p37 = scmp.eq.s32.totalorder %s36, 0
      %s39 = sadd.s32 %s38, 1
      %s40 = scalar_select %p37, %s38, %s39
      %p43 = pneg %p37
      %p44 = scmp.eq.s32.totalorder %s16, 3
      %p45 = por %p43, %p44
      %p46 = scmp.ne.s32.totalorder %s38, %s41
      %p47 = scmp.eq.s32.totalorder %s16, 0
      %p48 = por %p46, %p47
      %p49 = scmp.ne.s32.totalorder %s38, %s41
      %p50 = scmp.eq.s32.totalorder %s21, 3
      %p51 = por %p49, %p50
      %p52 = scmp.ne.s32.totalorder %s41, %s42
      %p53 = scmp.eq.s32.totalorder %s21, 0
      %p54 = por %p52, %p53
      %p55 = scmp.ne.s32.totalorder %s41, %s42
      %p56 = scmp.eq.s32.totalorder %s22, 3
      %p57 = por %p55, %p56
      %p59 = scmp.ne.s32.totalorder %s42, %s58
      %p60 = scmp.eq.s32.totalorder %s22, 0
      %p61 = por %p59, %p60
      %s62 = ssub.s32 %s23, %s35
      %s63 = ssub.s32 %s24, %s31
      %s64 = sor.u32 %s62, %s63
      %p65 = scmp.eq.s32.totalorder %s64, 0
      %s67 = sadd.s32 %s66, 1
      %s68 = scalar_select %p65, %s66, %s67
      %p71 = pneg %p65
      %p72 = scmp.eq.s32.totalorder %s16, 3
      %p73 = por %p71, %p72
      %p74 = scmp.ne.s32.totalorder %s66, %s69
      %p75 = scmp.eq.s32.totalorder %s16, 0
      %p76 = por %p74, %p75
      %p77 = scmp.ne.s32.totalorder %s66, %s69
      %p78 = scmp.eq.s32.totalorder %s21, 3
      %p79 = por %p77, %p78
      %p80 = scmp.ne.s32.totalorder %s69, %s70
      %p81 = scmp.eq.s32.totalorder %s21, 0
      %p82 = por %p80, %p81
      %p83 = scmp.ne.s32.totalorder %s69, %s70
      %p84 = scmp.eq.s32.totalorder %s22, 3
      %p85 = por %p83, %p84
      %p87 = scmp.ne.s32.totalorder %s70, %s86
      %p88 = scmp.eq.s32.totalorder %s22, 0
      %p89 = por %p87, %p88
      %s90 = ssub.s32 %s23, %s35
      %p91 = scmp.eq.s32.totalorder %s90, 0
      %s93 = sadd.s32 %s92, 1
      %s94 = scalar_select %p91, %s92, %s93
      %p97 = pneg %p91
      %p98 = scmp.eq.s32.totalorder %s16, 3
      %p99 = por %p97, %p98
      %p100 = scmp.ne.s32.totalorder %s92, %s95
      %p101 = scmp.eq.s32.totalorder %s16, 0
      %p102 = por %p100, %p101
      %p103 = scmp.ne.s32.totalorder %s92, %s95
      %p104 = scmp.eq.s32.totalorder %s21, 3
      %p105 = por %p103, %p104
      %p106 = scmp.ne.s32.totalorder %s95, %s96
      %p107 = scmp.eq.s32.totalorder %s21, 0
      %p108 = por %p106, %p107
      %p109 = scmp.ne.s32.totalorder %s95, %s96
      %p110 = scmp.eq.s32.totalorder %s22, 3
      %p111 = por %p109, %p110
      %p113 = scmp.ne.s32.totalorder %s96, %s112
      %p114 = scmp.eq.s32.totalorder %s22, 0
      %p115 = por %p113, %p114
      %s116 = ssub.s32 %s23, %s35
      %p117 = scmp.eq.s32.totalorder %s116, 0
      %s119 = sadd.s32 %s118, 1
      %s120 = scalar_select %p117, %s118, %s119
      %p123 = pneg %p117
      %p124 = scmp.eq.s32.totalorder %s16, 3
      %p125 = por %p123, %p124
      %p126 = scmp.ne.s32.totalorder %s118, %s121
      %p127 = scmp.eq.s32.totalorder %s16, 0
      %p128 = por %p126, %p127
      %p129 = scmp.ne.s32.totalorder %s118, %s121
      %p130 = scmp.eq.s32.totalorder %s21, 3
      %p131 = por %p129, %p130
      %p132 = scmp.ne.s32.totalorder %s121, %s122
      %p133 = scmp.eq.s32.totalorder %s21, 0
      %p134 = por %p132, %p133
      %p135 = scmp.ne.s32.totalorder %s121, %s122
      %p136 = scmp.eq.s32.totalorder %s22, 3
      %p137 = por %p135, %p136
      %p139 = scmp.ne.s32.totalorder %s122, %s138
      %p140 = scmp.eq.s32.totalorder %s22, 0
      %p141 = por %p139, %p140
      %p142 = scmp.le.s32.totalorder 1, %s16
      %p143 = scmp.lt.s32.totalorder %s16, 5
      %p144 = pnand %p142, %p143
      %p145 = pneg %p144
      // Predicated region
      $region9: #{_gelu_linear_2d.1} parent=5 // pred_check
        _
      $region10: #{_gelu_linear_2d.1} parent=5 // pred_check_branch
        %147 = sbr.rel (%p144) target = $region12
      $region11: #{_gelu_linear_2d.1} parent=5 // pred_region
        %s148 = ssub.s32 %s16, 1
        // Predicated region
        $region13: #{_gelu_linear_2d.1} parent=11 // pred_check
          %p149 = pneg %p108
        $region14: #{_gelu_linear_2d.1} parent=11 // pred_check_branch
          %151 = sbr.rel (%p149) target = $region16
        $region15: #{_gelu_linear_2d.1} parent=11 // pred_region
          %s152 = smul.u32 4, %s25
          %s154 = ssub.s32 64, 64
          %155 = vsyncadd [#allocation7], %s154
          %s156 = smul.addr %s152, 16
          %s157 = scalar_lea.hbm %s2, %s156
          %s159 = sshll.u32 [#allocation8], 4
          %s160 = int_to_ptr.vmem [resolvable:$true] %s159
          %162 = dma.hbm_to_vmem [thread:$0]  %s157, 64, %s160, [#allocation7]
        $region16: #{_gelu_linear_2d.1} parent=11 // pred_fallthru
          _
      $region12: #{_gelu_linear_2d.1} parent=5 // pred_fallthru
        _
      %p163 = scmp.lt.s32.totalorder %s16, 4
      // Predicated region
      $region17: #{_gelu_linear_2d.1} parent=5 // pred_check
        %p164 = pneg %p163
      $region18: #{_gelu_linear_2d.1} parent=5 // pred_check_branch
        %166 = sbr.rel (%p164) target = $region20
      $region19: #{_gelu_linear_2d.1} parent=5 // pred_region
        // Predicated region
        $region21: #{_gelu_linear_2d.1} parent=19 // pred_check
          %p167 = pneg %p48
        $region22: #{_gelu_linear_2d.1} parent=19 // pred_check_branch
          %169 = sbr.rel (%p167) target = $region24
        $region23: #{_gelu_linear_2d.1} parent=19 // pred_region
          %s170 = sand.u32 %s38, 1
          %s171 = scalar_lea.sflag [#allocation4], %s170
          %s172 = sand.u32 %s38, 1
          %s173 = smul.addr %s172, 800
          %s174 = scalar_lea.vmem [#allocation3], %s173
          %s175 = smul.u32 4, %s24
          %s177 = ssub.s32 12800, 12800
          %178 = vsyncadd %s171, %s177
          %s179 = smul.addr %s175, 128
          %s180 = scalar_lea.hbm %s0, %s179
          %s181 = sshll.u32 %s174, 4
          %s182 = int_to_ptr.vmem [resolvable:$true] %s181
          %187 = dma.hbm_to_vmem [thread:$0]  %s180, 12800, %s182, %s171, 2048, 512, 32
        $region24: #{_gelu_linear_2d.1} parent=19 // pred_fallthru
          _
        // Predicated region
        $region25: #{_gelu_linear_2d.1} parent=19 // pred_check
          %p188 = pneg %p76
        $region26: #{_gelu_linear_2d.1} parent=19 // pred_check_branch
          %190 = sbr.rel (%p188) target = $region28
        $region27: #{_gelu_linear_2d.1} parent=19 // pred_region
          %s191 = sand.u32 %s16, 1
          %s192 = scalar_lea.sflag [#allocation7], %s191
          %s193 = sand.u32 %s66, 1
          %s194 = smul.addr %s193, 2048
          %s195 = scalar_lea.vmem [#allocation6], %s194
          %s196 = smul.u32 64, %s23
          %s197 = smul.u32 4, %s24
          %s199 = ssub.s32 32768, 32768
          %200 = vsyncadd %s192, %s199
          %s201 = smul.addr %s196, 16
          %s202 = sadd.s32 %s197, %s201
          %s203 = smul.addr %s202, 128
          %s204 = scalar_lea.hbm %s1, %s203
          %s205 = sshll.u32 %s195, 4
          %s206 = int_to_ptr.vmem [resolvable:$true] %s205
          %211 = dma.hbm_to_vmem [thread:$0]  %s204, 32768, %s206, %s192, 2048, 512, 32
        $region28: #{_gelu_linear_2d.1} parent=19 // pred_fallthru
          _
      $region20: #{_gelu_linear_2d.1} parent=5 // pred_fallthru
        _
      %p212 = scmp.le.s32.totalorder 1, %s16
      %p213 = scmp.lt.s32.totalorder %s16, 5
      %p214 = pnand %p212, %p213
      %p215 = pneg %p214
      // Predicated region
      $region29: #{_gelu_linear_2d.1} parent=5 // pred_check
        _
      $region30: #{_gelu_linear_2d.1} parent=5 // pred_check_branch
        %217 = sbr.rel (%p214) target = $region32
      $region31: #{_gelu_linear_2d.1} parent=5 // pred_region
        %s218 = ssub.s32 %s16, 1
        %s219 = sand.u32 %s41, 1
        %s220 = scalar_lea.sflag [#allocation4], %s219
        %s221 = sand.u32 %s41, 1
        %s222 = smul.addr %s221, 800
        %s223 = scalar_lea.vmem [#allocation3], %s222
        // Predicated region
        $region33: #{_gelu_linear_2d.1} parent=31 // pred_check
          %p224 = pneg %p54
        $region34: #{_gelu_linear_2d.1} parent=31 // pred_check_branch
          %226 = sbr.rel (%p224) target = $region36
        $region35: #{_gelu_linear_2d.1} parent=31 // pred_region
          %227 = dma.done %s220, 12800
        $region36: #{_gelu_linear_2d.1} parent=31 // pred_fallthru
          _
        %s228 = sand.u32 %s21, 1
        %s229 = scalar_lea.sflag [#allocation7], %s228
        %s230 = sand.u32 %s69, 1
        %s231 = smul.addr %s230, 2048
        %s232 = scalar_lea.vmem [#allocation6], %s231
        // Predicated region
        $region37: #{_gelu_linear_2d.1} parent=31 // pred_check
          %p233 = pneg %p82
        $region38: #{_gelu_linear_2d.1} parent=31 // pred_check_branch
          %235 = sbr.rel (%p233) target = $region40
        $region39: #{_gelu_linear_2d.1} parent=31 // pred_region
          %236 = dma.done %s229, 32768
        $region40: #{_gelu_linear_2d.1} parent=31 // pred_fallthru
          _
        // Predicated region
        $region41: #{_gelu_linear_2d.1} parent=31 // pred_check
          %p237 = pneg %p108
        $region42: #{_gelu_linear_2d.1} parent=31 // pred_check_branch
          %239 = sbr.rel (%p237) target = $region44
        $region43: #{_gelu_linear_2d.1} parent=31 // pred_region
          %240 = dma.done [#allocation7], 64
        $region44: #{_gelu_linear_2d.1} parent=31 // pred_fallthru
          _
        %s241 = sand.u32 %s41, 1
        %s242 = scalar_lea.sflag [#allocation4], %s241
        %s243 = sand.u32 %s41, 1
        %s244 = smul.addr %s243, 800
        %s245 = scalar_lea.vmem [#allocation3], %s244
        %p246 = pneg %p54
        %p247 = pneg %p51
        %s248 = sand.u32 %s21, 1
        %s249 = scalar_lea.sflag [#allocation7], %s248
        %s250 = sand.u32 %s69, 1
        %s251 = smul.addr %s250, 2048
        %s252 = scalar_lea.vmem [#allocation6], %s251
        %p253 = pneg %p82
        %p254 = pneg %p79
        %p255 = pneg %p108
        %p256 = pneg %p105
        %p257 = pneg %p134
        %p258 = pneg %p131
        %s259 = smul.u32 4, %s26
        %s260 = smul.u32 64, %s25
        %s261 = smul.u32 4, %s26
        %s262 = smul.u32 4, %s25
        %s263 = smul.u32 4, %s25
        %p264 = scmp.eq.s32.totalorder %s26, 0
        // Predicated region
        $region45: #{_gelu_linear_2d.1} parent=31 // pred_check
          %p265 = pneg %p264
        $region46: #{_gelu_linear_2d.1} parent=31 // pred_check_branch
          %267 = sbr.rel (%p265) target = $region48
        $region47: #{_gelu_linear_2d.1} parent=31 // pred_region
          %v268 = vld [vmem:[#allocation8] sm:$0xf]
          %v270 = vlaneseq
          %v271 = vshrl.u32 %v270, 7
          %v272 = vsub.s32 0, %v271
          %v273 = vrot.slane %v268, %v272
          %v274 = vlaneseq
          %v275 = vshrl.u32 %v274, 7
          %v276 = vsub.s32 1, %v275
          %v277 = vrot.slane %v268, %v276
          %v278 = vlaneseq
          %v279 = vshrl.u32 %v278, 7
          %v280 = vsub.s32 2, %v279
          %v281 = vrot.slane %v268, %v280
          %v282 = vlaneseq
          %v283 = vshrl.u32 %v282, 7
          %v284 = vsub.s32 3, %v283
          %v285 = vrot.slane %v268, %v284
          %290 = vst [vmem:[#allocation2] sm:$0xff] %v273
          %291 = vst [vmem:[#allocation2 + $0x8] sm:$0xff] %v277
          %292 = vst [vmem:[#allocation2 + $0x10] sm:$0xff] %v281
          %293 = vst [vmem:[#allocation2 + $0x18] sm:$0xff] %v285
          %294 = vst [vmem:[#allocation2 + $0x20] sm:$0xff] %v273
          %295 = vst [vmem:[#allocation2 + $0x28] sm:$0xff] %v277
          %296 = vst [vmem:[#allocation2 + $0x30] sm:$0xff] %v281
          %297 = vst [vmem:[#allocation2 + $0x38] sm:$0xff] %v285
          %298 = vst [vmem:[#allocation2 + $0x40] sm:$0xff] %v273
          %299 = vst [vmem:[#allocation2 + $0x48] sm:$0xff] %v277
          %300 = vst [vmem:[#allocation2 + $0x50] sm:$0xff] %v281
          %301 = vst [vmem:[#allocation2 + $0x58] sm:$0xff] %v285
          %302 = vst [vmem:[#allocation2 + $0x60] sm:$0xff] %v273
          %303 = vst [vmem:[#allocation2 + $0x68] sm:$0xff] %v277
          %304 = vst [vmem:[#allocation2 + $0x70] sm:$0xff] %v281
          %305 = vst [vmem:[#allocation2 + $0x78] sm:$0xff] %v285
          %306 = vst [vmem:[#allocation2 + $0x80] sm:$0xff] %v273
          %307 = vst [vmem:[#allocation2 + $0x88] sm:$0xff] %v277
          %308 = vst [vmem:[#allocation2 + $0x90] sm:$0xff] %v281
          %309 = vst [vmem:[#allocation2 + $0x98] sm:$0xff] %v285
          %310 = vst [vmem:[#allocation2 + $0xa0] sm:$0xff] %v273
          %311 = vst [vmem:[#allocation2 + $0xa8] sm:$0xff] %v277
          %312 = vst [vmem:[#allocation2 + $0xb0] sm:$0xff] %v281
          %313 = vst [vmem:[#allocation2 + $0xb8] sm:$0xff] %v285
          %314 = vst [vmem:[#allocation2 + $0xc0] sm:$0xff] %v273
          %315 = vst [vmem:[#allocation2 + $0xc8] sm:$0xff] %v277
          %316 = vst [vmem:[#allocation2 + $0xd0] sm:$0xff] %v281
          %317 = vst [vmem:[#allocation2 + $0xd8] sm:$0xff] %v285
          %318 = vst [vmem:[#allocation2 + $0xe0] sm:$0xff] %v273
          %319 = vst [vmem:[#allocation2 + $0xe8] sm:$0xff] %v277
          %320 = vst [vmem:[#allocation2 + $0xf0] sm:$0xff] %v281
          %321 = vst [vmem:[#allocation2 + $0xf8] sm:$0xff] %v285
          %322 = vst [vmem:[#allocation2 + $0x100] sm:$0xff] %v273
          %323 = vst [vmem:[#allocation2 + $0x108] sm:$0xff] %v277
          %324 = vst [vmem:[#allocation2 + $0x110] sm:$0xff] %v281
          %325 = vst [vmem:[#allocation2 + $0x118] sm:$0xff] %v285
          %326 = vst [vmem:[#allocation2 + $0x120] sm:$0xff] %v273
          %327 = vst [vmem:[#allocation2 + $0x128] sm:$0xff] %v277
          %328 = vst [vmem:[#allocation2 + $0x130] sm:$0xff] %v281
          %329 = vst [vmem:[#allocation2 + $0x138] sm:$0xff] %v285
          %330 = vst [vmem:[#allocation2 + $0x140] sm:$0xff] %v273
          %331 = vst [vmem:[#allocation2 + $0x148] sm:$0xff] %v277
          %332 = vst [vmem:[#allocation2 + $0x150] sm:$0xff] %v281
          %333 = vst [vmem:[#allocation2 + $0x158] sm:$0xff] %v285
          %334 = vst [vmem:[#allocation2 + $0x160] sm:$0xff] %v273
          %335 = vst [vmem:[#allocation2 + $0x168] sm:$0xff] %v277
          %336 = vst [vmem:[#allocation2 + $0x170] sm:$0xff] %v281
          %337 = vst [vmem:[#allocation2 + $0x178] sm:$0xff] %v285
          %338 = vst [vmem:[#allocation2 + $0x180] sm:$0xff] %v273
          %339 = vst [vmem:[#allocation2 + $0x188] sm:$0xff] %v277
          %340 = vst [vmem:[#allocation2 + $0x190] sm:$0xff] %v281
          %341 = vst [vmem:[#allocation2 + $0x198] sm:$0xff] %v285
          %342 = vst [vmem:[#allocation2 + $0x1a0] sm:$0xff] %v273
          %343 = vst [vmem:[#allocation2 + $0x1a8] sm:$0xff] %v277
          %344 = vst [vmem:[#allocation2 + $0x1b0] sm:$0xff] %v281
          %345 = vst [vmem:[#allocation2 + $0x1b8] sm:$0xff] %v285
          %346 = vst [vmem:[#allocation2 + $0x1c0] sm:$0xff] %v273
          %347 = vst [vmem:[#allocation2 + $0x1c8] sm:$0xff] %v277
          %348 = vst [vmem:[#allocation2 + $0x1d0] sm:$0xff] %v281
          %349 = vst [vmem:[#allocation2 + $0x1d8] sm:$0xff] %v285
          %350 = vst [vmem:[#allocation2 + $0x1e0] sm:$0xff] %v273
          %351 = vst [vmem:[#allocation2 + $0x1e8] sm:$0xff] %v277
          %352 = vst [vmem:[#allocation2 + $0x1f0] sm:$0xff] %v281
          %353 = vst [vmem:[#allocation2 + $0x1f8] sm:$0xff] %v285
          %354 = vst [vmem:[#allocation2 + $0x200] sm:$0xff] %v273
          %355 = vst [vmem:[#allocation2 + $0x208] sm:$0xff] %v277
          %356 = vst [vmem:[#allocation2 + $0x210] sm:$0xff] %v281
          %357 = vst [vmem:[#allocation2 + $0x218] sm:$0xff] %v285
          %358 = vst [vmem:[#allocation2 + $0x220] sm:$0xff] %v273
          %359 = vst [vmem:[#allocation2 + $0x228] sm:$0xff] %v277
          %360 = vst [vmem:[#allocation2 + $0x230] sm:$0xff] %v281
          %361 = vst [vmem:[#allocation2 + $0x238] sm:$0xff] %v285
          %362 = vst [vmem:[#allocation2 + $0x240] sm:$0xff] %v273
          %363 = vst [vmem:[#allocation2 + $0x248] sm:$0xff] %v277
          %364 = vst [vmem:[#allocation2 + $0x250] sm:$0xff] %v281
          %365 = vst [vmem:[#allocation2 + $0x258] sm:$0xff] %v285
          %366 = vst [vmem:[#allocation2 + $0x260] sm:$0xff] %v273
          %367 = vst [vmem:[#allocation2 + $0x268] sm:$0xff] %v277
          %368 = vst [vmem:[#allocation2 + $0x270] sm:$0xff] %v281
          %369 = vst [vmem:[#allocation2 + $0x278] sm:$0xff] %v285
          %370 = vst [vmem:[#allocation2 + $0x280] sm:$0xff] %v273
          %371 = vst [vmem:[#allocation2 + $0x288] sm:$0xff] %v277
          %372 = vst [vmem:[#allocation2 + $0x290] sm:$0xff] %v281
          %373 = vst [vmem:[#allocation2 + $0x298] sm:$0xff] %v285
          %374 = vst [vmem:[#allocation2 + $0x2a0] sm:$0xff] %v273
          %375 = vst [vmem:[#allocation2 + $0x2a8] sm:$0xff] %v277
          %376 = vst [vmem:[#allocation2 + $0x2b0] sm:$0xff] %v281
          %377 = vst [vmem:[#allocation2 + $0x2b8] sm:$0xff] %v285
          %378 = vst [vmem:[#allocation2 + $0x2c0] sm:$0xff] %v273
          %379 = vst [vmem:[#allocation2 + $0x2c8] sm:$0xff] %v277
          %380 = vst [vmem:[#allocation2 + $0x2d0] sm:$0xff] %v281
          %381 = vst [vmem:[#allocation2 + $0x2d8] sm:$0xff] %v285
          %382 = vst [vmem:[#allocation2 + $0x2e0] sm:$0xff] %v273
          %383 = vst [vmem:[#allocation2 + $0x2e8] sm:$0xff] %v277
          %384 = vst [vmem:[#allocation2 + $0x2f0] sm:$0xff] %v281
          %385 = vst [vmem:[#allocation2 + $0x2f8] sm:$0xff] %v285
          %386 = vst [vmem:[#allocation2 + $0x300] sm:$0xf] %v273
          %387 = vst [vmem:[#allocation2 + $0x308] sm:$0xf] %v277
          %388 = vst [vmem:[#allocation2 + $0x310] sm:$0xf] %v281
          %389 = vst [vmem:[#allocation2 + $0x318] sm:$0xf] %v285
        $region48: #{_gelu_linear_2d.1} parent=31 // pred_fallthru
          _
        %v390 = vld [vmem:[%s223] sm:$0xff]
        %v391 = vld [vmem:[%s223 + $0x8] sm:$0xff]
        %v392 = vld [vmem:[%s223 + $0x10] sm:$0xff]
        %v393 = vld [vmem:[%s223 + $0x18] sm:$0xff]
        %v394 = vld [vmem:[%s223 + $0x20] sm:$0xff]
        %v395 = vld [vmem:[%s223 + $0x28] sm:$0xff]
        %v396 = vld [vmem:[%s223 + $0x30] sm:$0xff]
        %v397 = vld [vmem:[%s223 + $0x38] sm:$0xff]
        %v398 = vld [vmem:[%s223 + $0x40] sm:$0xff]
        %v399 = vld [vmem:[%s223 + $0x48] sm:$0xff]
        %v400 = vld [vmem:[%s223 + $0x50] sm:$0xff]
        %v401 = vld [vmem:[%s223 + $0x58] sm:$0xff]
        %v402 = vld [vmem:[%s223 + $0x60] sm:$0xff]
        %v403 = vld [vmem:[%s223 + $0x68] sm:$0xff]
        %v404 = vld [vmem:[%s223 + $0x70] sm:$0xff]
        %v405 = vld [vmem:[%s223 + $0x78] sm:$0xff]
        %v406 = vld [vmem:[%s223 + $0x80] sm:$0xff]
        %v407 = vld [vmem:[%s223 + $0x88] sm:$0xff]
        %v408 = vld [vmem:[%s223 + $0x90] sm:$0xff]
        %v409 = vld [vmem:[%s223 + $0x98] sm:$0xff]
        %v410 = vld [vmem:[%s223 + $0xa0] sm:$0xff]
        %v411 = vld [vmem:[%s223 + $0xa8] sm:$0xff]
        %v412 = vld [vmem:[%s223 + $0xb0] sm:$0xff]
        %v413 = vld [vmem:[%s223 + $0xb8] sm:$0xff]
        %v414 = vld [vmem:[%s223 + $0xc0] sm:$0xff]
        %v415 = vld [vmem:[%s223 + $0xc8] sm:$0xff]
        %v416 = vld [vmem:[%s223 + $0xd0] sm:$0xff]
        %v417 = vld [vmem:[%s223 + $0xd8] sm:$0xff]
        %v418 = vld [vmem:[%s223 + $0xe0] sm:$0xff]
        %v419 = vld [vmem:[%s223 + $0xe8] sm:$0xff]
        %v420 = vld [vmem:[%s223 + $0xf0] sm:$0xff]
        %v421 = vld [vmem:[%s223 + $0xf8] sm:$0xff]
        %v422 = vld [vmem:[%s223 + $0x100] sm:$0xff]
        %v423 = vld [vmem:[%s223 + $0x108] sm:$0xff]
        %v424 = vld [vmem:[%s223 + $0x110] sm:$0xff]
        %v425 = vld [vmem:[%s223 + $0x118] sm:$0xff]
        %v426 = vld [vmem:[%s223 + $0x120] sm:$0xff]
        %v427 = vld [vmem:[%s223 + $0x128] sm:$0xff]
        %v428 = vld [vmem:[%s223 + $0x130] sm:$0xff]
        %v429 = vld [vmem:[%s223 + $0x138] sm:$0xff]
        %v430 = vld [vmem:[%s223 + $0x140] sm:$0xff]
        %v431 = vld [vmem:[%s223 + $0x148] sm:$0xff]
        %v432 = vld [vmem:[%s223 + $0x150] sm:$0xff]
        %v433 = vld [vmem:[%s223 + $0x158] sm:$0xff]
        %v434 = vld [vmem:[%s223 + $0x160] sm:$0xff]
        %v435 = vld [vmem:[%s223 + $0x168] sm:$0xff]
        %v436 = vld [vmem:[%s223 + $0x170] sm:$0xff]
        %v437 = vld [vmem:[%s223 + $0x178] sm:$0xff]
        %v438 = vld [vmem:[%s223 + $0x180] sm:$0xff]
        %v439 = vld [vmem:[%s223 + $0x188] sm:$0xff]
        %v440 = vld [vmem:[%s223 + $0x190] sm:$0xff]
        %v441 = vld [vmem:[%s223 + $0x198] sm:$0xff]
        %v442 = vld [vmem:[%s223 + $0x1a0] sm:$0xff]
        %v443 = vld [vmem:[%s223 + $0x1a8] sm:$0xff]
        %v444 = vld [vmem:[%s223 + $0x1b0] sm:$0xff]
        %v445 = vld [vmem:[%s223 + $0x1b8] sm:$0xff]
        %v446 = vld [vmem:[%s223 + $0x1c0] sm:$0xff]
        %v447 = vld [vmem:[%s223 + $0x1c8] sm:$0xff]
        %v448 = vld [vmem:[%s223 + $0x1d0] sm:$0xff]
        %v449 = vld [vmem:[%s223 + $0x1d8] sm:$0xff]
        %v450 = vld [vmem:[%s223 + $0x1e0] sm:$0xff]
        %v451 = vld [vmem:[%s223 + $0x1e8] sm:$0xff]
        %v452 = vld [vmem:[%s223 + $0x1f0] sm:$0xff]
        %v453 = vld [vmem:[%s223 + $0x1f8] sm:$0xff]
        %v454 = vld [vmem:[%s223 + $0x200] sm:$0xff]
        %v455 = vld [vmem:[%s223 + $0x208] sm:$0xff]
        %v456 = vld [vmem:[%s223 + $0x210] sm:$0xff]
        %v457 = vld [vmem:[%s223 + $0x218] sm:$0xff]
        %v458 = vld [vmem:[%s223 + $0x220] sm:$0xff]
        %v459 = vld [vmem:[%s223 + $0x228] sm:$0xff]
        %v460 = vld [vmem:[%s223 + $0x230] sm:$0xff]
        %v461 = vld [vmem:[%s223 + $0x238] sm:$0xff]
        %v462 = vld [vmem:[%s223 + $0x240] sm:$0xff]
        %v463 = vld [vmem:[%s223 + $0x248] sm:$0xff]
        %v464 = vld [vmem:[%s223 + $0x250] sm:$0xff]
        %v465 = vld [vmem:[%s223 + $0x258] sm:$0xff]
        %v466 = vld [vmem:[%s223 + $0x260] sm:$0xff]
        %v467 = vld [vmem:[%s223 + $0x268] sm:$0xff]
        %v468 = vld [vmem:[%s223 + $0x270] sm:$0xff]
        %v469 = vld [vmem:[%s223 + $0x278] sm:$0xff]
        %v470 = vld [vmem:[%s223 + $0x280] sm:$0xff]
        %v471 = vld [vmem:[%s223 + $0x288] sm:$0xff]
        %v472 = vld [vmem:[%s223 + $0x290] sm:$0xff]
        %v473 = vld [vmem:[%s223 + $0x298] sm:$0xff]
        %v474 = vld [vmem:[%s223 + $0x2a0] sm:$0xff]
        %v475 = vld [vmem:[%s223 + $0x2a8] sm:$0xff]
        %v476 = vld [vmem:[%s223 + $0x2b0] sm:$0xff]
        %v477 = vld [vmem:[%s223 + $0x2b8] sm:$0xff]
        %v478 = vld [vmem:[%s223 + $0x2c0] sm:$0xff]
        %v479 = vld [vmem:[%s223 + $0x2c8] sm:$0xff]
        %v480 = vld [vmem:[%s223 + $0x2d0] sm:$0xff]
        %v481 = vld [vmem:[%s223 + $0x2d8] sm:$0xff]
        %v482 = vld [vmem:[%s223 + $0x2e0] sm:$0xff]
        %v483 = vld [vmem:[%s223 + $0x2e8] sm:$0xff]
        %v484 = vld [vmem:[%s223 + $0x2f0] sm:$0xff]
        %v485 = vld [vmem:[%s223 + $0x2f8] sm:$0xff]
        %v486 = vld [vmem:[%s223 + $0x300] sm:$0xf]
        %v487 = vld [vmem:[%s223 + $0x308] sm:$0xf]
        %v488 = vld [vmem:[%s223 + $0x310] sm:$0xf]
        %v489 = vld [vmem:[%s223 + $0x318] sm:$0xf]
        %v490 = vmul.f32 %v390, 0.5
        %v491 = vmul.f32 %v391, 0.5
        %v492 = vmul.f32 %v392, 0.5
        %v493 = vmul.f32 %v393, 0.5
        %v494 = vmul.f32 %v394, 0.5
        %v495 = vmul.f32 %v395, 0.5
        %v496 = vmul.f32 %v396, 0.5
        %v497 = vmul.f32 %v397, 0.5
        %v498 = vmul.f32 %v398, 0.5
        %v499 = vmul.f32 %v399, 0.5
        %v500 = vmul.f32 %v400, 0.5
        %v501 = vmul.f32 %v401, 0.5
        %v502 = vmul.f32 %v402, 0.5
        %v503 = vmul.f32 %v403, 0.5
        %v504 = vmul.f32 %v404, 0.5
        %v505 = vmul.f32 %v405, 0.5
        %v506 = vmul.f32 %v406, 0.5
        %v507 = vmul.f32 %v407, 0.5
        %v508 = vmul.f32 %v408, 0.5
        %v509 = vmul.f32 %v409, 0.5
        %v510 = vmul.f32 %v410, 0.5
        %v511 = vmul.f32 %v411, 0.5
        %v512 = vmul.f32 %v412, 0.5
        %v513 = vmul.f32 %v413, 0.5
        %v514 = vmul.f32 %v414, 0.5
        %v515 = vmul.f32 %v415, 0.5
        %v516 = vmul.f32 %v416, 0.5
        %v517 = vmul.f32 %v417, 0.5
        %v518 = vmul.f32 %v418, 0.5
        %v519 = vmul.f32 %v419, 0.5
        %v520 = vmul.f32 %v420, 0.5
        %v521 = vmul.f32 %v421, 0.5
        %v522 = vmul.f32 %v422, 0.5
        %v523 = vmul.f32 %v423, 0.5
        %v524 = vmul.f32 %v424, 0.5
        %v525 = vmul.f32 %v425, 0.5
        %v526 = vmul.f32 %v426, 0.5
        %v527 = vmul.f32 %v427, 0.5
        %v528 = vmul.f32 %v428, 0.5
        %v529 = vmul.f32 %v429, 0.5
        %v530 = vmul.f32 %v430, 0.5
        %v531 = vmul.f32 %v431, 0.5
        %v532 = vmul.f32 %v432, 0.5
        %v533 = vmul.f32 %v433, 0.5
        %v534 = vmul.f32 %v434, 0.5
        %v535 = vmul.f32 %v435, 0.5
        %v536 = vmul.f32 %v436, 0.5
        %v537 = vmul.f32 %v437, 0.5
        %v538 = vmul.f32 %v438, 0.5
        %v539 = vmul.f32 %v439, 0.5
        %v540 = vmul.f32 %v440, 0.5
        %v541 = vmul.f32 %v441, 0.5
        %v542 = vmul.f32 %v442, 0.5
        %v543 = vmul.f32 %v443, 0.5
        %v544 = vmul.f32 %v444, 0.5
        %v545 = vmul.f32 %v445, 0.5
        %v546 = vmul.f32 %v446, 0.5
        %v547 = vmul.f32 %v447, 0.5
        %v548 = vmul.f32 %v448, 0.5
        %v549 = vmul.f32 %v449, 0.5
        %v550 = vmul.f32 %v450, 0.5
        %v551 = vmul.f32 %v451, 0.5
        %v552 = vmul.f32 %v452, 0.5
        %v553 = vmul.f32 %v453, 0.5
        %v554 = vmul.f32 %v454, 0.5
        %v555 = vmul.f32 %v455, 0.5
        %v556 = vmul.f32 %v456, 0.5
        %v557 = vmul.f32 %v457, 0.5
        %v558 = vmul.f32 %v458, 0.5
        %v559 = vmul.f32 %v459, 0.5
        %v560 = vmul.f32 %v460, 0.5
        %v561 = vmul.f32 %v461, 0.5
        %v562 = vmul.f32 %v462, 0.5
        %v563 = vmul.f32 %v463, 0.5
        %v564 = vmul.f32 %v464, 0.5
        %v565 = vmul.f32 %v465, 0.5
        %v566 = vmul.f32 %v466, 0.5
        %v567 = vmul.f32 %v467, 0.5
        %v568 = vmul.f32 %v468, 0.5
        %v569 = vmul.f32 %v469, 0.5
        %v570 = vmul.f32 %v470, 0.5
        %v571 = vmul.f32 %v471, 0.5
        %v572 = vmul.f32 %v472, 0.5
        %v573 = vmul.f32 %v473, 0.5
        %v574 = vmul.f32 %v474, 0.5
        %v575 = vmul.f32 %v475, 0.5
        %v576 = vmul.f32 %v476, 0.5
        %v577 = vmul.f32 %v477, 0.5
        %v578 = vmul.f32 %v478, 0.5
        %v579 = vmul.f32 %v479, 0.5
        %v580 = vmul.f32 %v480, 0.5
        %v581 = vmul.f32 %v481, 0.5
        %v582 = vmul.f32 %v482, 0.5
        %v583 = vmul.f32 %v483, 0.5
        %v584 = vmul.f32 %v484, 0.5
        %v585 = vmul.f32 %v485, 0.5
        %v586 = vmul.f32 %v486, 0.5
        %v587 = vmul.f32 %v487, 0.5
        %v588 = vmul.f32 %v488, 0.5
        %v589 = vmul.f32 %v489, 0.5
        %v590 = vmul.f32 %v390, 0.70710677
        %v591 = vmul.f32 %v391, 0.70710677
        %v592 = vmul.f32 %v392, 0.70710677
        %v593 = vmul.f32 %v393, 0.70710677
        %v594 = vmul.f32 %v394, 0.70710677
        %v595 = vmul.f32 %v395, 0.70710677
        %v596 = vmul.f32 %v396, 0.70710677
        %v597 = vmul.f32 %v397, 0.70710677
        %v598 = vmul.f32 %v398, 0.70710677
        %v599 = vmul.f32 %v399, 0.70710677
        %v600 = vmul.f32 %v400, 0.70710677
        %v601 = vmul.f32 %v401, 0.70710677
        %v602 = vmul.f32 %v402, 0.70710677
        %v603 = vmul.f32 %v403, 0.70710677
        %v604 = vmul.f32 %v404, 0.70710677
        %v605 = vmul.f32 %v405, 0.70710677
        %v606 = vmul.f32 %v406, 0.70710677
        %v607 = vmul.f32 %v407, 0.70710677
        %v608 = vmul.f32 %v408, 0.70710677
        %v609 = vmul.f32 %v409, 0.70710677
        %v610 = vmul.f32 %v410, 0.70710677
        %v611 = vmul.f32 %v411, 0.70710677
        %v612 = vmul.f32 %v412, 0.70710677
        %v613 = vmul.f32 %v413, 0.70710677
        %v614 = vmul.f32 %v414, 0.70710677
        %v615 = vmul.f32 %v415, 0.70710677
        %v616 = vmul.f32 %v416, 0.70710677
        %v617 = vmul.f32 %v417, 0.70710677
        %v618 = vmul.f32 %v418, 0.70710677
        %v619 = vmul.f32 %v419, 0.70710677
        %v620 = vmul.f32 %v420, 0.70710677
        %v621 = vmul.f32 %v421, 0.70710677
        %v622 = vmul.f32 %v422, 0.70710677
        %v623 = vmul.f32 %v423, 0.70710677
        %v624 = vmul.f32 %v424, 0.70710677
        %v625 = vmul.f32 %v425, 0.70710677
        %v626 = vmul.f32 %v426, 0.70710677
        %v627 = vmul.f32 %v427, 0.70710677
        %v628 = vmul.f32 %v428, 0.70710677
        %v629 = vmul.f32 %v429, 0.70710677
        %v630 = vmul.f32 %v430, 0.70710677
        %v631 = vmul.f32 %v431, 0.70710677
        %v632 = vmul.f32 %v432, 0.70710677
        %v633 = vmul.f32 %v433, 0.70710677
        %v634 = vmul.f32 %v434, 0.70710677
        %v635 = vmul.f32 %v435, 0.70710677
        %v636 = vmul.f32 %v436, 0.70710677
        %v637 = vmul.f32 %v437, 0.70710677
        %v638 = vmul.f32 %v438, 0.70710677
        %v639 = vmul.f32 %v439, 0.70710677
        %v640 = vmul.f32 %v440, 0.70710677
        %v641 = vmul.f32 %v441, 0.70710677
        %v642 = vmul.f32 %v442, 0.70710677
        %v643 = vmul.f32 %v443, 0.70710677
        %v644 = vmul.f32 %v444, 0.70710677
        %v645 = vmul.f32 %v445, 0.70710677
        %v646 = vmul.f32 %v446, 0.70710677
        %v647 = vmul.f32 %v447, 0.70710677
        %v648 = vmul.f32 %v448, 0.70710677
        %v649 = vmul.f32 %v449, 0.70710677
        %v650 = vmul.f32 %v450, 0.70710677
        %v651 = vmul.f32 %v451, 0.70710677
        %v652 = vmul.f32 %v452, 0.70710677
        %v653 = vmul.f32 %v453, 0.70710677
        %v654 = vmul.f32 %v454, 0.70710677
        %v655 = vmul.f32 %v455, 0.70710677
        %v656 = vmul.f32 %v456, 0.70710677
        %v657 = vmul.f32 %v457, 0.70710677
        %v658 = vmul.f32 %v458, 0.70710677
        %v659 = vmul.f32 %v459, 0.70710677
        %v660 = vmul.f32 %v460, 0.70710677
        %v661 = vmul.f32 %v461, 0.70710677
        %v662 = vmul.f32 %v462, 0.70710677
        %v663 = vmul.f32 %v463, 0.70710677
        %v664 = vmul.f32 %v464, 0.70710677
        %v665 = vmul.f32 %v465, 0.70710677
        %v666 = vmul.f32 %v466, 0.70710677
        %v667 = vmul.f32 %v467, 0.70710677
        %v668 = vmul.f32 %v468, 0.70710677
        %v669 = vmul.f32 %v469, 0.70710677
        %v670 = vmul.f32 %v470, 0.70710677
        %v671 = vmul.f32 %v471, 0.70710677
        %v672 = vmul.f32 %v472, 0.70710677
        %v673 = vmul.f32 %v473, 0.70710677
        %v674 = vmul.f32 %v474, 0.70710677
        %v675 = vmul.f32 %v475, 0.70710677
        %v676 = vmul.f32 %v476, 0.70710677
        %v677 = vmul.f32 %v477, 0.70710677
        %v678 = vmul.f32 %v478, 0.70710677
        %v679 = vmul.f32 %v479, 0.70710677
        %v680 = vmul.f32 %v480, 0.70710677
        %v681 = vmul.f32 %v481, 0.70710677
        %v682 = vmul.f32 %v482, 0.70710677
        %v683 = vmul.f32 %v483, 0.70710677
        %v684 = vmul.f32 %v484, 0.70710677
        %v685 = vmul.f32 %v485, 0.70710677
        %v686 = vmul.f32 %v486, 0.70710677
        %v687 = vmul.f32 %v487, 0.70710677
        %v688 = vmul.f32 %v488, 0.70710677
        %v689 = vmul.f32 %v489, 0.70710677
        %v690 = verf.f32.pop %v590
        %v691 = verf.f32.pop %v591
        %v692 = verf.f32.pop %v592
        %v693 = verf.f32.pop %v593
        %v694 = verf.f32.pop %v594
        %v695 = verf.f32.pop %v595
        %v696 = verf.f32.pop %v596
        %v697 = verf.f32.pop %v597
        %v698 = verf.f32.pop %v598
        %v699 = verf.f32.pop %v599
        %v700 = verf.f32.pop %v600
        %v701 = verf.f32.pop %v601
        %v702 = verf.f32.pop %v602
        %v703 = verf.f32.pop %v603
        %v704 = verf.f32.pop %v604
        %v705 = verf.f32.pop %v605
        %v706 = verf.f32.pop %v606
        %v707 = verf.f32.pop %v607
        %v708 = verf.f32.pop %v608
        %v709 = verf.f32.pop %v609
        %v710 = verf.f32.pop %v610
        %v711 = verf.f32.pop %v611
        %v712 = verf.f32.pop %v612
        %v713 = verf.f32.pop %v613
        %v714 = verf.f32.pop %v614
        %v715 = verf.f32.pop %v615
        %v716 = verf.f32.pop %v616
        %v717 = verf.f32.pop %v617
        %v718 = verf.f32.pop %v618
        %v719 = verf.f32.pop %v619
        %v720 = verf.f32.pop %v620
        %v721 = verf.f32.pop %v621
        %v722 = verf.f32.pop %v622
        %v723 = verf.f32.pop %v623
        %v724 = verf.f32.pop %v624
        %v725 = verf.f32.pop %v625
        %v726 = verf.f32.pop %v626
        %v727 = verf.f32.pop %v627
        %v728 = verf.f32.pop %v628
        %v729 = verf.f32.pop %v629
        %v730 = verf.f32.pop %v630
        %v731 = verf.f32.pop %v631
        %v732 = verf.f32.pop %v632
        %v733 = verf.f32.pop %v633
        %v734 = verf.f32.pop %v634
        %v735 = verf.f32.pop %v635
        %v736 = verf.f32.pop %v636
        %v737 = verf.f32.pop %v637
        %v738 = verf.f32.pop %v638
        %v739 = verf.f32.pop %v639
        %v740 = verf.f32.pop %v640
        %v741 = verf.f32.pop %v641
        %v742 = verf.f32.pop %v642
        %v743 = verf.f32.pop %v643
        %v744 = verf.f32.pop %v644
        %v745 = verf.f32.pop %v645
        %v746 = verf.f32.pop %v646
        %v747 = verf.f32.pop %v647
        %v748 = verf.f32.pop %v648
        %v749 = verf.f32.pop %v649
        %v750 = verf.f32.pop %v650
        %v751 = verf.f32.pop %v651
        %v752 = verf.f32.pop %v652
        %v753 = verf.f32.pop %v653
        %v754 = verf.f32.pop %v654
        %v755 = verf.f32.pop %v655
        %v756 = verf.f32.pop %v656
        %v757 = verf.f32.pop %v657
        %v758 = verf.f32.pop %v658
        %v759 = verf.f32.pop %v659
        %v760 = verf.f32.pop %v660
        %v761 = verf.f32.pop %v661
        %v762 = verf.f32.pop %v662
        %v763 = verf.f32.pop %v663
        %v764 = verf.f32.pop %v664
        %v765 = verf.f32.pop %v665
        %v766 = verf.f32.pop %v666
        %v767 = verf.f32.pop %v667
        %v768 = verf.f32.pop %v668
        %v769 = verf.f32.pop %v669
        %v770 = verf.f32.pop %v670
        %v771 = verf.f32.pop %v671
        %v772 = verf.f32.pop %v672
        %v773 = verf.f32.pop %v673
        %v774 = verf.f32.pop %v674
        %v775 = verf.f32.pop %v675
        %v776 = verf.f32.pop %v676
        %v777 = verf.f32.pop %v677
        %v778 = verf.f32.pop %v678
        %v779 = verf.f32.pop %v679
        %v780 = verf.f32.pop %v680
        %v781 = verf.f32.pop %v681
        %v782 = verf.f32.pop %v682
        %v783 = verf.f32.pop %v683
        %v784 = verf.f32.pop %v684
        %v785 = verf.f32.pop %v685
        %v786 = verf.f32.pop %v686
        %v787 = verf.f32.pop %v687
        %v788 = verf.f32.pop %v688
        %v789 = verf.f32.pop %v689
        %v790 = vadd.f32 %v690, 1.0
        %v791 = vadd.f32 %v691, 1.0
        %v792 = vadd.f32 %v692, 1.0
        %v793 = vadd.f32 %v693, 1.0
        %v794 = vadd.f32 %v694, 1.0
        %v795 = vadd.f32 %v695, 1.0
        %v796 = vadd.f32 %v696, 1.0
        %v797 = vadd.f32 %v697, 1.0
        %v798 = vadd.f32 %v698, 1.0
        %v799 = vadd.f32 %v699, 1.0
        %v800 = vadd.f32 %v700, 1.0
        %v801 = vadd.f32 %v701, 1.0
        %v802 = vadd.f32 %v702, 1.0
        %v803 = vadd.f32 %v703, 1.0
        %v804 = vadd.f32 %v704, 1.0
        %v805 = vadd.f32 %v705, 1.0
        %v806 = vadd.f32 %v706, 1.0
        %v807 = vadd.f32 %v707, 1.0
        %v808 = vadd.f32 %v708, 1.0
        %v809 = vadd.f32 %v709, 1.0
        %v810 = vadd.f32 %v710, 1.0
        %v811 = vadd.f32 %v711, 1.0
        %v812 = vadd.f32 %v712, 1.0
        %v813 = vadd.f32 %v713, 1.0
        %v814 = vadd.f32 %v714, 1.0
        %v815 = vadd.f32 %v715, 1.0
        %v816 = vadd.f32 %v716, 1.0
        %v817 = vadd.f32 %v717, 1.0
        %v818 = vadd.f32 %v718, 1.0
        %v819 = vadd.f32 %v719, 1.0
        %v820 = vadd.f32 %v720, 1.0
        %v821 = vadd.f32 %v721, 1.0
        %v822 = vadd.f32 %v722, 1.0
        %v823 = vadd.f32 %v723, 1.0
        %v824 = vadd.f32 %v724, 1.0
        %v825 = vadd.f32 %v725, 1.0
        %v826 = vadd.f32 %v726, 1.0
        %v827 = vadd.f32 %v727, 1.0
        %v828 = vadd.f32 %v728, 1.0
        %v829 = vadd.f32 %v729, 1.0
        %v830 = vadd.f32 %v730, 1.0
        %v831 = vadd.f32 %v731, 1.0
        %v832 = vadd.f32 %v732, 1.0
        %v833 = vadd.f32 %v733, 1.0
        %v834 = vadd.f32 %v734, 1.0
        %v835 = vadd.f32 %v735, 1.0
        %v836 = vadd.f32 %v736, 1.0
        %v837 = vadd.f32 %v737, 1.0
        %v838 = vadd.f32 %v738, 1.0
        %v839 = vadd.f32 %v739, 1.0
        %v840 = vadd.f32 %v740, 1.0
        %v841 = vadd.f32 %v741, 1.0
        %v842 = vadd.f32 %v742, 1.0
        %v843 = vadd.f32 %v743, 1.0
        %v844 = vadd.f32 %v744, 1.0
        %v845 = vadd.f32 %v745, 1.0
        %v846 = vadd.f32 %v746, 1.0
        %v847 = vadd.f32 %v747, 1.0
        %v848 = vadd.f32 %v748, 1.0
        %v849 = vadd.f32 %v749, 1.0
        %v850 = vadd.f32 %v750, 1.0
        %v851 = vadd.f32 %v751, 1.0
        %v852 = vadd.f32 %v752, 1.0
        %v853 = vadd.f32 %v753, 1.0
        %v854 = vadd.f32 %v754, 1.0
        %v855 = vadd.f32 %v755, 1.0
        %v856 = vadd.f32 %v756, 1.0
        %v857 = vadd.f32 %v757, 1.0
        %v858 = vadd.f32 %v758, 1.0
        %v859 = vadd.f32 %v759, 1.0
        %v860 = vadd.f32 %v760, 1.0
        %v861 = vadd.f32 %v761, 1.0
        %v862 = vadd.f32 %v762, 1.0
        %v863 = vadd.f32 %v763, 1.0
        %v864 = vadd.f32 %v764, 1.0
        %v865 = vadd.f32 %v765, 1.0
        %v866 = vadd.f32 %v766, 1.0
        %v867 = vadd.f32 %v767, 1.0
        %v868 = vadd.f32 %v768, 1.0
        %v869 = vadd.f32 %v769, 1.0
        %v870 = vadd.f32 %v770, 1.0
        %v871 = vadd.f32 %v771, 1.0
        %v872 = vadd.f32 %v772, 1.0
        %v873 = vadd.f32 %v773, 1.0
        %v874 = vadd.f32 %v774, 1.0
        %v875 = vadd.f32 %v775, 1.0
        %v876 = vadd.f32 %v776, 1.0
        %v877 = vadd.f32 %v777, 1.0
        %v878 = vadd.f32 %v778, 1.0
        %v879 = vadd.f32 %v779, 1.0
        %v880 = vadd.f32 %v780, 1.0
        %v881 = vadd.f32 %v781, 1.0
        %v882 = vadd.f32 %v782, 1.0
        %v883 = vadd.f32 %v783, 1.0
        %v884 = vadd.f32 %v784, 1.0
        %v885 = vadd.f32 %v785, 1.0
        %v886 = vadd.f32 %v786, 1.0
        %v887 = vadd.f32 %v787, 1.0
        %v888 = vadd.f32 %v788, 1.0
        %v889 = vadd.f32 %v789, 1.0
        %v890 = vmul.f32 %v490, %v790
        %v891 = vmul.f32 %v491, %v791
        %v892 = vmul.f32 %v492, %v792
        %v893 = vmul.f32 %v493, %v793
        %v894 = vmul.f32 %v494, %v794
        %v895 = vmul.f32 %v495, %v795
        %v896 = vmul.f32 %v496, %v796
        %v897 = vmul.f32 %v497, %v797
        %v898 = vmul.f32 %v498, %v798
        %v899 = vmul.f32 %v499, %v799
        %v900 = vmul.f32 %v500, %v800
        %v901 = vmul.f32 %v501, %v801
        %v902 = vmul.f32 %v502, %v802
        %v903 = vmul.f32 %v503, %v803
        %v904 = vmul.f32 %v504, %v804
        %v905 = vmul.f32 %v505, %v805
        %v906 = vmul.f32 %v506, %v806
        %v907 = vmul.f32 %v507, %v807
        %v908 = vmul.f32 %v508, %v808
        %v909 = vmul.f32 %v509, %v809
        %v910 = vmul.f32 %v510, %v810
        %v911 = vmul.f32 %v511, %v811
        %v912 = vmul.f32 %v512, %v812
        %v913 = vmul.f32 %v513, %v813
        %v914 = vmul.f32 %v514, %v814
        %v915 = vmul.f32 %v515, %v815
        %v916 = vmul.f32 %v516, %v816
        %v917 = vmul.f32 %v517, %v817
        %v918 = vmul.f32 %v518, %v818
        %v919 = vmul.f32 %v519, %v819
        %v920 = vmul.f32 %v520, %v820
        %v921 = vmul.f32 %v521, %v821
        %v922 = vmul.f32 %v522, %v822
        %v923 = vmul.f32 %v523, %v823
        %v924 = vmul.f32 %v524, %v824
        %v925 = vmul.f32 %v525, %v825
        %v926 = vmul.f32 %v526, %v826
        %v927 = vmul.f32 %v527, %v827
        %v928 = vmul.f32 %v528, %v828
        %v929 = vmul.f32 %v529, %v829
        %v930 = vmul.f32 %v530, %v830
        %v931 = vmul.f32 %v531, %v831
        %v932 = vmul.f32 %v532, %v832
        %v933 = vmul.f32 %v533, %v833
        %v934 = vmul.f32 %v534, %v834
        %v935 = vmul.f32 %v535, %v835
        %v936 = vmul.f32 %v536, %v836
        %v937 = vmul.f32 %v537, %v837
        %v938 = vmul.f32 %v538, %v838
        %v939 = vmul.f32 %v539, %v839
        %v940 = vmul.f32 %v540, %v840
        %v941 = vmul.f32 %v541, %v841
        %v942 = vmul.f32 %v542, %v842
        %v943 = vmul.f32 %v543, %v843
        %v944 = vmul.f32 %v544, %v844
        %v945 = vmul.f32 %v545, %v845
        %v946 = vmul.f32 %v546, %v846
        %v947 = vmul.f32 %v547, %v847
        %v948 = vmul.f32 %v548, %v848
        %v949 = vmul.f32 %v549, %v849
        %v950 = vmul.f32 %v550, %v850
        %v951 = vmul.f32 %v551, %v851
        %v952 = vmul.f32 %v552, %v852
        %v953 = vmul.f32 %v553, %v853
        %v954 = vmul.f32 %v554, %v854
        %v955 = vmul.f32 %v555, %v855
        %v956 = vmul.f32 %v556, %v856
        %v957 = vmul.f32 %v557, %v857
        %v958 = vmul.f32 %v558, %v858
        %v959 = vmul.f32 %v559, %v859
        %v960 = vmul.f32 %v560, %v860
        %v961 = vmul.f32 %v561, %v861
        %v962 = vmul.f32 %v562, %v862
        %v963 = vmul.f32 %v563, %v863
        %v964 = vmul.f32 %v564, %v864
        %v965 = vmul.f32 %v565, %v865
        %v966 = vmul.f32 %v566, %v866
        %v967 = vmul.f32 %v567, %v867
        %v968 = vmul.f32 %v568, %v868
        %v969 = vmul.f32 %v569, %v869
        %v970 = vmul.f32 %v570, %v870
        %v971 = vmul.f32 %v571, %v871
        %v972 = vmul.f32 %v572, %v872
        %v973 = vmul.f32 %v573, %v873
        %v974 = vmul.f32 %v574, %v874
        %v975 = vmul.f32 %v575, %v875
        %v976 = vmul.f32 %v576, %v876
        %v977 = vmul.f32 %v577, %v877
        %v978 = vmul.f32 %v578, %v878
        %v979 = vmul.f32 %v579, %v879
        %v980 = vmul.f32 %v580, %v880
        %v981 = vmul.f32 %v581, %v881
        %v982 = vmul.f32 %v582, %v882
        %v983 = vmul.f32 %v583, %v883
        %v984 = vmul.f32 %v584, %v884
        %v985 = vmul.f32 %v585, %v885
        %v986 = vmul.f32 %v586, %v886
        %v987 = vmul.f32 %v587, %v887
        %v988 = vmul.f32 %v588, %v888
        %v989 = vmul.f32 %v589, %v889
        %v990 = vld [vmem:[%s232] sm:$0xff]
        %v991 = vld [vmem:[%s232 + $0x8] sm:$0xff]
        %v992 = vld [vmem:[%s232 + $0x10] sm:$0xff]
        %v993 = vld [vmem:[%s232 + $0x18] sm:$0xff]
        %v994 = vld [vmem:[%s232 + $0x20] sm:$0xff]
        %v995 = vld [vmem:[%s232 + $0x28] sm:$0xff]
        %v996 = vld [vmem:[%s232 + $0x30] sm:$0xff]
        %v997 = vld [vmem:[%s232 + $0x38] sm:$0xff]
        %v998 = vld [vmem:[%s232 + $0x40] sm:$0xff]
        %v999 = vld [vmem:[%s232 + $0x48] sm:$0xff]
        %v1000 = vld [vmem:[%s232 + $0x50] sm:$0xff]
        %v1001 = vld [vmem:[%s232 + $0x58] sm:$0xff]
        %v1002 = vld [vmem:[%s232 + $0x60] sm:$0xff]
        %v1003 = vld [vmem:[%s232 + $0x68] sm:$0xff]
        %v1004 = vld [vmem:[%s232 + $0x70] sm:$0xff]
        %v1005 = vld [vmem:[%s232 + $0x78] sm:$0xff]
        %v1006 = vld [vmem:[%s232 + $0x80] sm:$0xff]
        %v1007 = vld [vmem:[%s232 + $0x88] sm:$0xff]
        %v1008 = vld [vmem:[%s232 + $0x90] sm:$0xff]
        %v1009 = vld [vmem:[%s232 + $0x98] sm:$0xff]
        %v1010 = vld [vmem:[%s232 + $0xa0] sm:$0xff]
        %v1011 = vld [vmem:[%s232 + $0xa8] sm:$0xff]
        %v1012 = vld [vmem:[%s232 + $0xb0] sm:$0xff]
        %v1013 = vld [vmem:[%s232 + $0xb8] sm:$0xff]
        %v1014 = vld [vmem:[%s232 + $0xc0] sm:$0xff]
        %v1015 = vld [vmem:[%s232 + $0xc8] sm:$0xff]
        %v1016 = vld [vmem:[%s232 + $0xd0] sm:$0xff]
        %v1017 = vld [vmem:[%s232 + $0xd8] sm:$0xff]
        %v1018 = vld [vmem:[%s232 + $0xe0] sm:$0xff]
        %v1019 = vld [vmem:[%s232 + $0xe8] sm:$0xff]
        %v1020 = vld [vmem:[%s232 + $0xf0] sm:$0xff]
        %v1021 = vld [vmem:[%s232 + $0xf8] sm:$0xff]
        %v1022 = vld [vmem:[%s232 + $0x100] sm:$0xff]
        %v1023 = vld [vmem:[%s232 + $0x108] sm:$0xff]
        %v1024 = vld [vmem:[%s232 + $0x110] sm:$0xff]
        %v1025 = vld [vmem:[%s232 + $0x118] sm:$0xff]
        %v1026 = vld [vmem:[%s232 + $0x120] sm:$0xff]
        %v1027 = vld [vmem:[%s232 + $0x128] sm:$0xff]
        %v1028 = vld [vmem:[%s232 + $0x130] sm:$0xff]
        %v1029 = vld [vmem:[%s232 + $0x138] sm:$0xff]
        %v1030 = vld [vmem:[%s232 + $0x140] sm:$0xff]
        %v1031 = vld [vmem:[%s232 + $0x148] sm:$0xff]
        %v1032 = vld [vmem:[%s232 + $0x150] sm:$0xff]
        %v1033 = vld [vmem:[%s232 + $0x158] sm:$0xff]
        %v1034 = vld [vmem:[%s232 + $0x160] sm:$0xff]
        %v1035 = vld [vmem:[%s232 + $0x168] sm:$0xff]
        %v1036 = vld [vmem:[%s232 + $0x170] sm:$0xff]
        %v1037 = vld [vmem:[%s232 + $0x178] sm:$0xff]
        %v1038 = vld [vmem:[%s232 + $0x180] sm:$0xff]
        %v1039 = vld [vmem:[%s232 + $0x188] sm:$0xff]
        %v1040 = vld [vmem:[%s232 + $0x190] sm:$0xff]
        %v1041 = vld [vmem:[%s232 + $0x198] sm:$0xff]
        %v1042 = vld [vmem:[%s232 + $0x1a0] sm:$0xff]
        %v1043 = vld [vmem:[%s232 + $0x1a8] sm:$0xff]
        %v1044 = vld [vmem:[%s232 + $0x1b0] sm:$0xff]
        %v1045 = vld [vmem:[%s232 + $0x1b8] sm:$0xff]
        %v1046 = vld [vmem:[%s232 + $0x1c0] sm:$0xff]
        %v1047 = vld [vmem:[%s232 + $0x1c8] sm:$0xff]
        %v1048 = vld [vmem:[%s232 + $0x1d0] sm:$0xff]
        %v1049 = vld [vmem:[%s232 + $0x1d8] sm:$0xff]
        %v1050 = vld [vmem:[%s232 + $0x1e0] sm:$0xff]
        %v1051 = vld [vmem:[%s232 + $0x1e8] sm:$0xff]
        %v1052 = vld [vmem:[%s232 + $0x1f0] sm:$0xff]
        %v1053 = vld [vmem:[%s232 + $0x1f8] sm:$0xff]
        %v1054 = vld [vmem:[%s232 + $0x200] sm:$0xff]
        %v1055 = vld [vmem:[%s232 + $0x208] sm:$0xff]
        %v1056 = vld [vmem:[%s232 + $0x210] sm:$0xff]
        %v1057 = vld [vmem:[%s232 + $0x218] sm:$0xff]
        %v1058 = vld [vmem:[%s232 + $0x220] sm:$0xff]
        %v1059 = vld [vmem:[%s232 + $0x228] sm:$0xff]
        %v1060 = vld [vmem:[%s232 + $0x230] sm:$0xff]
        %v1061 = vld [vmem:[%s232 + $0x238] sm:$0xff]
        %v1062 = vld [vmem:[%s232 + $0x240] sm:$0xff]
        %v1063 = vld [vmem:[%s232 + $0x248] sm:$0xff]
        %v1064 = vld [vmem:[%s232 + $0x250] sm:$0xff]
        %v1065 = vld [vmem:[%s232 + $0x258] sm:$0xff]
        %v1066 = vld [vmem:[%s232 + $0x260] sm:$0xff]
        %v1067 = vld [vmem:[%s232 + $0x268] sm:$0xff]
        %v1068 = vld [vmem:[%s232 + $0x270] sm:$0xff]
        %v1069 = vld [vmem:[%s232 + $0x278] sm:$0xff]
        %v1070 = vld [vmem:[%s232 + $0x280] sm:$0xff]
        %v1071 = vld [vmem:[%s232 + $0x288] sm:$0xff]
        %v1072 = vld [vmem:[%s232 + $0x290] sm:$0xff]
        %v1073 = vld [vmem:[%s232 + $0x298] sm:$0xff]
        %v1074 = vld [vmem:[%s232 + $0x2a0] sm:$0xff]
        %v1075 = vld [vmem:[%s232 + $0x2a8] sm:$0xff]
        %v1076 = vld [vmem:[%s232 + $0x2b0] sm:$0xff]
        %v1077 = vld [vmem:[%s232 + $0x2b8] sm:$0xff]
        %v1078 = vld [vmem:[%s232 + $0x2c0] sm:$0xff]
        %v1079 = vld [vmem:[%s232 + $0x2c8] sm:$0xff]
        %v1080 = vld [vmem:[%s232 + $0x2d0] sm:$0xff]
        %v1081 = vld [vmem:[%s232 + $0x2d8] sm:$0xff]
        %v1082 = vld [vmem:[%s232 + $0x2e0] sm:$0xff]
        %v1083 = vld [vmem:[%s232 + $0x2e8] sm:$0xff]
        %v1084 = vld [vmem:[%s232 + $0x2f0] sm:$0xff]
        %v1085 = vld [vmem:[%s232 + $0x2f8] sm:$0xff]
        %v1086 = vld [vmem:[%s232 + $0x300] sm:$0xff]
        %v1087 = vld [vmem:[%s232 + $0x308] sm:$0xff]
        %v1088 = vld [vmem:[%s232 + $0x310] sm:$0xff]
        %v1089 = vld [vmem:[%s232 + $0x318] sm:$0xff]
        %v1090 = vld [vmem:[%s232 + $0x320] sm:$0xff]
        %v1091 = vld [vmem:[%s232 + $0x328] sm:$0xff]
        %v1092 = vld [vmem:[%s232 + $0x330] sm:$0xff]
        %v1093 = vld [vmem:[%s232 + $0x338] sm:$0xff]
        %v1094 = vld [vmem:[%s232 + $0x340] sm:$0xff]
        %v1095 = vld [vmem:[%s232 + $0x348] sm:$0xff]
        %v1096 = vld [vmem:[%s232 + $0x350] sm:$0xff]
        %v1097 = vld [vmem:[%s232 + $0x358] sm:$0xff]
        %v1098 = vld [vmem:[%s232 + $0x360] sm:$0xff]
        %v1099 = vld [vmem:[%s232 + $0x368] sm:$0xff]
        %v1100 = vld [vmem:[%s232 + $0x370] sm:$0xff]
        %v1101 = vld [vmem:[%s232 + $0x378] sm:$0xff]
        %v1102 = vld [vmem:[%s232 + $0x380] sm:$0xff]
        %v1103 = vld [vmem:[%s232 + $0x388] sm:$0xff]
        %v1104 = vld [vmem:[%s232 + $0x390] sm:$0xff]
        %v1105 = vld [vmem:[%s232 + $0x398] sm:$0xff]
        %v1106 = vld [vmem:[%s232 + $0x3a0] sm:$0xff]
        %v1107 = vld [vmem:[%s232 + $0x3a8] sm:$0xff]
        %v1108 = vld [vmem:[%s232 + $0x3b0] sm:$0xff]
        %v1109 = vld [vmem:[%s232 + $0x3b8] sm:$0xff]
        %v1110 = vld [vmem:[%s232 + $0x3c0] sm:$0xff]
        %v1111 = vld [vmem:[%s232 + $0x3c8] sm:$0xff]
        %v1112 = vld [vmem:[%s232 + $0x3d0] sm:$0xff]
        %v1113 = vld [vmem:[%s232 + $0x3d8] sm:$0xff]
        %v1114 = vld [vmem:[%s232 + $0x3e0] sm:$0xff]
        %v1115 = vld [vmem:[%s232 + $0x3e8] sm:$0xff]
        %v1116 = vld [vmem:[%s232 + $0x3f0] sm:$0xff]
        %v1117 = vld [vmem:[%s232 + $0x3f8] sm:$0xff]
        %v1118 = vld [vmem:[%s232 + $0x400] sm:$0xff]
        %v1119 = vld [vmem:[%s232 + $0x408] sm:$0xff]
        %v1120 = vld [vmem:[%s232 + $0x410] sm:$0xff]
        %v1121 = vld [vmem:[%s232 + $0x418] sm:$0xff]
        %v1122 = vld [vmem:[%s232 + $0x420] sm:$0xff]
        %v1123 = vld [vmem:[%s232 + $0x428] sm:$0xff]
        %v1124 = vld [vmem:[%s232 + $0x430] sm:$0xff]
        %v1125 = vld [vmem:[%s232 + $0x438] sm:$0xff]
        %v1126 = vld [vmem:[%s232 + $0x440] sm:$0xff]
        %v1127 = vld [vmem:[%s232 + $0x448] sm:$0xff]
        %v1128 = vld [vmem:[%s232 + $0x450] sm:$0xff]
        %v1129 = vld [vmem:[%s232 + $0x458] sm:$0xff]
        %v1130 = vld [vmem:[%s232 + $0x460] sm:$0xff]
        %v1131 = vld [vmem:[%s232 + $0x468] sm:$0xff]
        %v1132 = vld [vmem:[%s232 + $0x470] sm:$0xff]
        %v1133 = vld [vmem:[%s232 + $0x478] sm:$0xff]
        %v1134 = vld [vmem:[%s232 + $0x480] sm:$0xff]
        %v1135 = vld [vmem:[%s232 + $0x488] sm:$0xff]
        %v1136 = vld [vmem:[%s232 + $0x490] sm:$0xff]
        %v1137 = vld [vmem:[%s232 + $0x498] sm:$0xff]
        %v1138 = vld [vmem:[%s232 + $0x4a0] sm:$0xff]
        %v1139 = vld [vmem:[%s232 + $0x4a8] sm:$0xff]
        %v1140 = vld [vmem:[%s232 + $0x4b0] sm:$0xff]
        %v1141 = vld [vmem:[%s232 + $0x4b8] sm:$0xff]
        %v1142 = vld [vmem:[%s232 + $0x4c0] sm:$0xff]
        %v1143 = vld [vmem:[%s232 + $0x4c8] sm:$0xff]
        %v1144 = vld [vmem:[%s232 + $0x4d0] sm:$0xff]
        %v1145 = vld [vmem:[%s232 + $0x4d8] sm:$0xff]
        %v1146 = vld [vmem:[%s232 + $0x4e0] sm:$0xff]
        %v1147 = vld [vmem:[%s232 + $0x4e8] sm:$0xff]
        %v1148 = vld [vmem:[%s232 + $0x4f0] sm:$0xff]
        %v1149 = vld [vmem:[%s232 + $0x4f8] sm:$0xff]
        %v1150 = vld [vmem:[%s232 + $0x500] sm:$0xff]
        %v1151 = vld [vmem:[%s232 + $0x508] sm:$0xff]
        %v1152 = vld [vmem:[%s232 + $0x510] sm:$0xff]
        %v1153 = vld [vmem:[%s232 + $0x518] sm:$0xff]
        %v1154 = vld [vmem:[%s232 + $0x520] sm:$0xff]
        %v1155 = vld [vmem:[%s232 + $0x528] sm:$0xff]
        %v1156 = vld [vmem:[%s232 + $0x530] sm:$0xff]
        %v1157 = vld [vmem:[%s232 + $0x538] sm:$0xff]
        %v1158 = vld [vmem:[%s232 + $0x540] sm:$0xff]
        %v1159 = vld [vmem:[%s232 + $0x548] sm:$0xff]
        %v1160 = vld [vmem:[%s232 + $0x550] sm:$0xff]
        %v1161 = vld [vmem:[%s232 + $0x558] sm:$0xff]
        %v1162 = vld [vmem:[%s232 + $0x560] sm:$0xff]
        %v1163 = vld [vmem:[%s232 + $0x568] sm:$0xff]
        %v1164 = vld [vmem:[%s232 + $0x570] sm:$0xff]
        %v1165 = vld [vmem:[%s232 + $0x578] sm:$0xff]
        %v1166 = vld [vmem:[%s232 + $0x580] sm:$0xff]
        %v1167 = vld [vmem:[%s232 + $0x588] sm:$0xff]
        %v1168 = vld [vmem:[%s232 + $0x590] sm:$0xff]
        %v1169 = vld [vmem:[%s232 + $0x598] sm:$0xff]
        %v1170 = vld [vmem:[%s232 + $0x5a0] sm:$0xff]
        %v1171 = vld [vmem:[%s232 + $0x5a8] sm:$0xff]
        %v1172 = vld [vmem:[%s232 + $0x5b0] sm:$0xff]
        %v1173 = vld [vmem:[%s232 + $0x5b8] sm:$0xff]
        %v1174 = vld [vmem:[%s232 + $0x5c0] sm:$0xff]
        %v1175 = vld [vmem:[%s232 + $0x5c8] sm:$0xff]
        %v1176 = vld [vmem:[%s232 + $0x5d0] sm:$0xff]
        %v1177 = vld [vmem:[%s232 + $0x5d8] sm:$0xff]
        %v1178 = vld [vmem:[%s232 + $0x5e0] sm:$0xff]
        %v1179 = vld [vmem:[%s232 + $0x5e8] sm:$0xff]
        %v1180 = vld [vmem:[%s232 + $0x5f0] sm:$0xff]
        %v1181 = vld [vmem:[%s232 + $0x5f8] sm:$0xff]
        %v1182 = vld [vmem:[%s232 + $0x600] sm:$0xff]
        %v1183 = vld [vmem:[%s232 + $0x608] sm:$0xff]
        %v1184 = vld [vmem:[%s232 + $0x610] sm:$0xff]
        %v1185 = vld [vmem:[%s232 + $0x618] sm:$0xff]
        %v1186 = vld [vmem:[%s232 + $0x620] sm:$0xff]
        %v1187 = vld [vmem:[%s232 + $0x628] sm:$0xff]
        %v1188 = vld [vmem:[%s232 + $0x630] sm:$0xff]
        %v1189 = vld [vmem:[%s232 + $0x638] sm:$0xff]
        %v1190 = vld [vmem:[%s232 + $0x640] sm:$0xff]
        %v1191 = vld [vmem:[%s232 + $0x648] sm:$0xff]
        %v1192 = vld [vmem:[%s232 + $0x650] sm:$0xff]
        %v1193 = vld [vmem:[%s232 + $0x658] sm:$0xff]
        %v1194 = vld [vmem:[%s232 + $0x660] sm:$0xff]
        %v1195 = vld [vmem:[%s232 + $0x668] sm:$0xff]
        %v1196 = vld [vmem:[%s232 + $0x670] sm:$0xff]
        %v1197 = vld [vmem:[%s232 + $0x678] sm:$0xff]
        %v1198 = vld [vmem:[%s232 + $0x680] sm:$0xff]
        %v1199 = vld [vmem:[%s232 + $0x688] sm:$0xff]
        %v1200 = vld [vmem:[%s232 + $0x690] sm:$0xff]
        %v1201 = vld [vmem:[%s232 + $0x698] sm:$0xff]
        %v1202 = vld [vmem:[%s232 + $0x6a0] sm:$0xff]
        %v1203 = vld [vmem:[%s232 + $0x6a8] sm:$0xff]
        %v1204 = vld [vmem:[%s232 + $0x6b0] sm:$0xff]
        %v1205 = vld [vmem:[%s232 + $0x6b8] sm:$0xff]
        %v1206 = vld [vmem:[%s232 + $0x6c0] sm:$0xff]
        %v1207 = vld [vmem:[%s232 + $0x6c8] sm:$0xff]
        %v1208 = vld [vmem:[%s232 + $0x6d0] sm:$0xff]
        %v1209 = vld [vmem:[%s232 + $0x6d8] sm:$0xff]
        %v1210 = vld [vmem:[%s232 + $0x6e0] sm:$0xff]
        %v1211 = vld [vmem:[%s232 + $0x6e8] sm:$0xff]
        %v1212 = vld [vmem:[%s232 + $0x6f0] sm:$0xff]
        %v1213 = vld [vmem:[%s232 + $0x6f8] sm:$0xff]
        %v1214 = vld [vmem:[%s232 + $0x700] sm:$0xff]
        %v1215 = vld [vmem:[%s232 + $0x708] sm:$0xff]
        %v1216 = vld [vmem:[%s232 + $0x710] sm:$0xff]
        %v1217 = vld [vmem:[%s232 + $0x718] sm:$0xff]
        %v1218 = vld [vmem:[%s232 + $0x720] sm:$0xff]
        %v1219 = vld [vmem:[%s232 + $0x728] sm:$0xff]
        %v1220 = vld [vmem:[%s232 + $0x730] sm:$0xff]
        %v1221 = vld [vmem:[%s232 + $0x738] sm:$0xff]
        %v1222 = vld [vmem:[%s232 + $0x740] sm:$0xff]
        %v1223 = vld [vmem:[%s232 + $0x748] sm:$0xff]
        %v1224 = vld [vmem:[%s232 + $0x750] sm:$0xff]
        %v1225 = vld [vmem:[%s232 + $0x758] sm:$0xff]
        %v1226 = vld [vmem:[%s232 + $0x760] sm:$0xff]
        %v1227 = vld [vmem:[%s232 + $0x768] sm:$0xff]
        %v1228 = vld [vmem:[%s232 + $0x770] sm:$0xff]
        %v1229 = vld [vmem:[%s232 + $0x778] sm:$0xff]
        %v1230 = vld [vmem:[%s232 + $0x780] sm:$0xff]
        %v1231 = vld [vmem:[%s232 + $0x788] sm:$0xff]
        %v1232 = vld [vmem:[%s232 + $0x790] sm:$0xff]
        %v1233 = vld [vmem:[%s232 + $0x798] sm:$0xff]
        %v1234 = vld [vmem:[%s232 + $0x7a0] sm:$0xff]
        %v1235 = vld [vmem:[%s232 + $0x7a8] sm:$0xff]
        %v1236 = vld [vmem:[%s232 + $0x7b0] sm:$0xff]
        %v1237 = vld [vmem:[%s232 + $0x7b8] sm:$0xff]
        %v1238 = vld [vmem:[%s232 + $0x7c0] sm:$0xff]
        %v1239 = vld [vmem:[%s232 + $0x7c8] sm:$0xff]
        %v1240 = vld [vmem:[%s232 + $0x7d0] sm:$0xff]
        %v1241 = vld [vmem:[%s232 + $0x7d8] sm:$0xff]
        %v1242 = vld [vmem:[%s232 + $0x7e0] sm:$0xff]
        %v1243 = vld [vmem:[%s232 + $0x7e8] sm:$0xff]
        %v1244 = vld [vmem:[%s232 + $0x7f0] sm:$0xff]
        %v1245 = vld [vmem:[%s232 + $0x7f8] sm:$0xff]
        %v1246 = vld [vmem:[#allocation2] sm:$0xff]
        %v1247 = vld [vmem:[#allocation2 + $0x8] sm:$0xff]
        %v1248 = vld [vmem:[#allocation2 + $0x10] sm:$0xff]
        %v1249 = vld [vmem:[#allocation2 + $0x18] sm:$0xff]
        %v1250 = vld [vmem:[#allocation2 + $0x20] sm:$0xff]
        %v1251 = vld [vmem:[#allocation2 + $0x28] sm:$0xff]
        %v1252 = vld [vmem:[#allocation2 + $0x30] sm:$0xff]
        %v1253 = vld [vmem:[#allocation2 + $0x38] sm:$0xff]
        %v1254 = vld [vmem:[#allocation2 + $0x40] sm:$0xff]
        %v1255 = vld [vmem:[#allocation2 + $0x48] sm:$0xff]
        %v1256 = vld [vmem:[#allocation2 + $0x50] sm:$0xff]
        %v1257 = vld [vmem:[#allocation2 + $0x58] sm:$0xff]
        %v1258 = vld [vmem:[#allocation2 + $0x60] sm:$0xff]
        %v1259 = vld [vmem:[#allocation2 + $0x68] sm:$0xff]
        %v1260 = vld [vmem:[#allocation2 + $0x70] sm:$0xff]
        %v1261 = vld [vmem:[#allocation2 + $0x78] sm:$0xff]
        %v1262 = vld [vmem:[#allocation2 + $0x80] sm:$0xff]
        %v1263 = vld [vmem:[#allocation2 + $0x88] sm:$0xff]
        %v1264 = vld [vmem:[#allocation2 + $0x90] sm:$0xff]
        %v1265 = vld [vmem:[#allocation2 + $0x98] sm:$0xff]
        %v1266 = vld [vmem:[#allocation2 + $0xa0] sm:$0xff]
        %v1267 = vld [vmem:[#allocation2 + $0xa8] sm:$0xff]
        %v1268 = vld [vmem:[#allocation2 + $0xb0] sm:$0xff]
        %v1269 = vld [vmem:[#allocation2 + $0xb8] sm:$0xff]
        %v1270 = vld [vmem:[#allocation2 + $0xc0] sm:$0xff]
        %v1271 = vld [vmem:[#allocation2 + $0xc8] sm:$0xff]
        %v1272 = vld [vmem:[#allocation2 + $0xd0] sm:$0xff]
        %v1273 = vld [vmem:[#allocation2 + $0xd8] sm:$0xff]
        %v1274 = vld [vmem:[#allocation2 + $0xe0] sm:$0xff]
        %v1275 = vld [vmem:[#allocation2 + $0xe8] sm:$0xff]
        %v1276 = vld [vmem:[#allocation2 + $0xf0] sm:$0xff]
        %v1277 = vld [vmem:[#allocation2 + $0xf8] sm:$0xff]
        %v1278 = vld [vmem:[#allocation2 + $0x100] sm:$0xff]
        %v1279 = vld [vmem:[#allocation2 + $0x108] sm:$0xff]
        %v1280 = vld [vmem:[#allocation2 + $0x110] sm:$0xff]
        %v1281 = vld [vmem:[#allocation2 + $0x118] sm:$0xff]
        %v1282 = vld [vmem:[#allocation2 + $0x120] sm:$0xff]
        %v1283 = vld [vmem:[#allocation2 + $0x128] sm:$0xff]
        %v1284 = vld [vmem:[#allocation2 + $0x130] sm:$0xff]
        %v1285 = vld [vmem:[#allocation2 + $0x138] sm:$0xff]
        %v1286 = vld [vmem:[#allocation2 + $0x140] sm:$0xff]
        %v1287 = vld [vmem:[#allocation2 + $0x148] sm:$0xff]
        %v1288 = vld [vmem:[#allocation2 + $0x150] sm:$0xff]
        %v1289 = vld [vmem:[#allocation2 + $0x158] sm:$0xff]
        %v1290 = vld [vmem:[#allocation2 + $0x160] sm:$0xff]
        %v1291 = vld [vmem:[#allocation2 + $0x168] sm:$0xff]
        %v1292 = vld [vmem:[#allocation2 + $0x170] sm:$0xff]
        %v1293 = vld [vmem:[#allocation2 + $0x178] sm:$0xff]
        %v1294 = vld [vmem:[#allocation2 + $0x180] sm:$0xff]
        %v1295 = vld [vmem:[#allocation2 + $0x188] sm:$0xff]
        %v1296 = vld [vmem:[#allocation2 + $0x190] sm:$0xff]
        %v1297 = vld [vmem:[#allocation2 + $0x198] sm:$0xff]
        %v1298 = vld [vmem:[#allocation2 + $0x1a0] sm:$0xff]
        %v1299 = vld [vmem:[#allocation2 + $0x1a8] sm:$0xff]
        %v1300 = vld [vmem:[#allocation2 + $0x1b0] sm:$0xff]
        %v1301 = vld [vmem:[#allocation2 + $0x1b8] sm:$0xff]
        %v1302 = vld [vmem:[#allocation2 + $0x1c0] sm:$0xff]
        %v1303 = vld [vmem:[#allocation2 + $0x1c8] sm:$0xff]
        %v1304 = vld [vmem:[#allocation2 + $0x1d0] sm:$0xff]
        %v1305 = vld [vmem:[#allocation2 + $0x1d8] sm:$0xff]
        %v1306 = vld [vmem:[#allocation2 + $0x1e0] sm:$0xff]
        %v1307 = vld [vmem:[#allocation2 + $0x1e8] sm:$0xff]
        %v1308 = vld [vmem:[#allocation2 + $0x1f0] sm:$0xff]
        %v1309 = vld [vmem:[#allocation2 + $0x1f8] sm:$0xff]
        %v1310 = vld [vmem:[#allocation2 + $0x200] sm:$0xff]
        %v1311 = vld [vmem:[#allocation2 + $0x208] sm:$0xff]
        %v1312 = vld [vmem:[#allocation2 + $0x210] sm:$0xff]
        %v1313 = vld [vmem:[#allocation2 + $0x218] sm:$0xff]
        %v1314 = vld [vmem:[#allocation2 + $0x220] sm:$0xff]
        %v1315 = vld [vmem:[#allocation2 + $0x228] sm:$0xff]
        %v1316 = vld [vmem:[#allocation2 + $0x230] sm:$0xff]
        %v1317 = vld [vmem:[#allocation2 + $0x238] sm:$0xff]
        %v1318 = vld [vmem:[#allocation2 + $0x240] sm:$0xff]
        %v1319 = vld [vmem:[#allocation2 + $0x248] sm:$0xff]
        %v1320 = vld [vmem:[#allocation2 + $0x250] sm:$0xff]
        %v1321 = vld [vmem:[#allocation2 + $0x258] sm:$0xff]
        %v1322 = vld [vmem:[#allocation2 + $0x260] sm:$0xff]
        %v1323 = vld [vmem:[#allocation2 + $0x268] sm:$0xff]
        %v1324 = vld [vmem:[#allocation2 + $0x270] sm:$0xff]
        %v1325 = vld [vmem:[#allocation2 + $0x278] sm:$0xff]
        %v1326 = vld [vmem:[#allocation2 + $0x280] sm:$0xff]
        %v1327 = vld [vmem:[#allocation2 + $0x288] sm:$0xff]
        %v1328 = vld [vmem:[#allocation2 + $0x290] sm:$0xff]
        %v1329 = vld [vmem:[#allocation2 + $0x298] sm:$0xff]
        %v1330 = vld [vmem:[#allocation2 + $0x2a0] sm:$0xff]
        %v1331 = vld [vmem:[#allocation2 + $0x2a8] sm:$0xff]
        %v1332 = vld [vmem:[#allocation2 + $0x2b0] sm:$0xff]
        %v1333 = vld [vmem:[#allocation2 + $0x2b8] sm:$0xff]
        %v1334 = vld [vmem:[#allocation2 + $0x2c0] sm:$0xff]
        %v1335 = vld [vmem:[#allocation2 + $0x2c8] sm:$0xff]
        %v1336 = vld [vmem:[#allocation2 + $0x2d0] sm:$0xff]
        %v1337 = vld [vmem:[#allocation2 + $0x2d8] sm:$0xff]
        %v1338 = vld [vmem:[#allocation2 + $0x2e0] sm:$0xff]
        %v1339 = vld [vmem:[#allocation2 + $0x2e8] sm:$0xff]
        %v1340 = vld [vmem:[#allocation2 + $0x2f0] sm:$0xff]
        %v1341 = vld [vmem:[#allocation2 + $0x2f8] sm:$0xff]
        %v1342 = vld [vmem:[#allocation2 + $0x300] sm:$0xf]
        %v1343 = vld [vmem:[#allocation2 + $0x308] sm:$0xf]
        %v1344 = vld [vmem:[#allocation2 + $0x310] sm:$0xf]
        %v1345 = vld [vmem:[#allocation2 + $0x318] sm:$0xf]
        %1346 = vmatprep.subr.mxu0 %v991
        %1347 = vmatpush1.xpose.msra.mxu0 %v990
        %1348 = vmatprep.subr.mxu0 %v995
        %1349 = vmatpush1.xpose.msra.mxu0 %v994
        %1350 = vmatprep.subr.mxu0 %v999
        %1351 = vmatpush1.xpose.msra.mxu0 %v998
        %1352 = vmatprep.subr.mxu0 %v1003
        %1353 = vmatpush1.xpose.msra.mxu0 %v1002
        %1354 = vmatprep.subr.mxu0 %v1007
        %1355 = vmatpush1.xpose.msra.mxu0 %v1006
        %1356 = vmatprep.subr.mxu0 %v1011
        %1357 = vmatpush1.xpose.msra.mxu0 %v1010
        %1358 = vmatprep.subr.mxu0 %v1015
        %1359 = vmatpush1.xpose.msra.mxu0 %v1014
        %1360 = vmatprep.subr.mxu0 %v1019
        %1361 = vmatpush1.xpose.msra.mxu0 %v1018
        %1362 = vmatprep.subr.mxu0 %v1023
        %1363 = vmatpush1.xpose.msra.mxu0 %v1022
        %1364 = vmatprep.subr.mxu0 %v1027
        %1365 = vmatpush1.xpose.msra.mxu0 %v1026
        %1366 = vmatprep.subr.mxu0 %v1031
        %1367 = vmatpush1.xpose.msra.mxu0 %v1030
        %1368 = vmatprep.subr.mxu0 %v1035
        %1369 = vmatpush1.xpose.msra.mxu0 %v1034
        %1370 = vmatprep.subr.mxu0 %v1039
        %1371 = vmatpush1.xpose.msra.mxu0 %v1038
        %1372 = vmatprep.subr.mxu0 %v1043
        %1373 = vmatpush1.xpose.msra.mxu0 %v1042
        %1374 = vmatprep.subr.mxu0 %v1047
        %1375 = vmatpush1.xpose.msra.mxu0 %v1046
        %1376 = vmatprep.subr.mxu0 %v1051
        %1377 = vmatpush1.xpose.msra.mxu0 %v1050
        %1378 = vmatprep.subr.mxu0 %v1055
        %1379 = vmatpush1.xpose.msra.mxu0 %v1054
        %1380 = vmatprep.subr.mxu0 %v1059
        %1381 = vmatpush1.xpose.msra.mxu0 %v1058
        %1382 = vmatprep.subr.mxu0 %v1063
        %1383 = vmatpush1.xpose.msra.mxu0 %v1062
        %1384 = vmatprep.subr.mxu0 %v1067
        %1385 = vmatpush1.xpose.msra.mxu0 %v1066
        %1386 = vmatprep.subr.mxu0 %v1071
        %1387 = vmatpush1.xpose.msra.mxu0 %v1070
        %1388 = vmatprep.subr.mxu0 %v1075
        %1389 = vmatpush1.xpose.msra.mxu0 %v1074
        %1390 = vmatprep.subr.mxu0 %v1079
        %1391 = vmatpush1.xpose.msra.mxu0 %v1078
        %1392 = vmatprep.subr.mxu0 %v1083
        %1393 = vmatpush1.xpose.msra.mxu0 %v1082
        %1394 = vmatprep.subr.mxu0 %v1087
        %1395 = vmatpush1.xpose.msra.mxu0 %v1086
        %1396 = vmatprep.subr.mxu0 %v1091
        %1397 = vmatpush1.xpose.msra.mxu0 %v1090
        %1398 = vmatprep.subr.mxu0 %v1095
        %1399 = vmatpush1.xpose.msra.mxu0 %v1094
        %1400 = vmatprep.subr.mxu0 %v1099
        %1401 = vmatpush1.xpose.msra.mxu0 %v1098
        %1402 = vmatprep.subr.mxu0 %v1103
        %1403 = vmatpush1.xpose.msra.mxu0 %v1102
        %1404 = vmatprep.subr.mxu0 %v1107
        %1405 = vmatpush1.xpose.msra.mxu0 %v1106
        %1406 = vmatprep.subr.mxu0 %v1111
        %1407 = vmatpush1.xpose.msra.mxu0 %v1110
        %1408 = vmatprep.subr.mxu0 %v1115
        %1409 = vmatpush1.xpose.msra.mxu0 %v1114
        %1410 = vmatprep.mubr.f32.mxu0 %v891
        %1411 = vmatmul.mubr.f32.gmra.mrb[0].mxu0 %v890
        %v1412 = vpop.f32.mrb[0].mxu0
        %v1413 = vadd.f32 0.0, %v1412
        %v1414 = vpop.f32.mrb[0].mxu0
        %v1415 = vadd.f32 0.0, %v1414
        %1416 = vmatprep.mubr.f32.mxu0 %v895
        %1417 = vmatmul.mubr.f32.gmra.mrb[0].mxu0 %v894
        %v1418 = vpop.f32.mrb[0].mxu0
        %v1419 = vadd.f32 0.0, %v1418
        %v1420 = vpop.f32.mrb[0].mxu0
        %v1421 = vadd.f32 0.0, %v1420
        %1422 = vmatprep.mubr.f32.mxu0 %v899
        %1423 = vmatmul.mubr.f32.gmra.mrb[0].mxu0 %v898
        %v1424 = vpop.f32.mrb[0].mxu0
        %v1425 = vadd.f32 0.0, %v1424
        %v1426 = vpop.f32.mrb[0].mxu0
        %v1427 = vadd.f32 0.0, %v1426
        %1428 = vmatprep.mubr.f32.mxu0 %v903
        %1429 = vmatmul.mubr.f32.gmra.mrb[0].mxu0 %v902
        %v1430 = vpop.f32.mrb[0].mxu0
        %v1431 = vadd.f32 0.0, %v1430
        %v1432 = vpop.f32.mrb[0].mxu0
        %v1433 = vadd.f32 0.0, %v1432
        %1434 = vmatprep.mubr.f32.mxu0 %v907
        %1435 = vmatmul.mubr.f32.gmra.mrb[0].mxu0 %v906
        %v1436 = vpop.f32.mrb[0].mxu0
        %v1437 = vadd.f32 0.0, %v1436
        %v1438 = vpop.f32.mrb[0].mxu0
        %v1439 = vadd.f32 0.0, %v1438
        %1440 = vmatprep.mubr.f32.mxu0 %v911
        %1441 = vmatmul.mubr.f32.gmra.mrb[0].mxu0 %v910
        %v1442 = vpop.f32.mrb[0].mxu0
        %v1443 = vadd.f32 0.0, %v1442
        %v1444 = vpop.f32.mrb[0].mxu0
        %v1445 = vadd.f32 0.0, %v1444
        %1446 = vmatprep.mubr.f32.mxu0 %v915
        %1447 = vmatmul.mubr.f32.gmra.mrb[0].mxu0 %v914
        %v1448 = vpop.f32.mrb[0].mxu0
        %v1449 = vadd.f32 0.0, %v1448
        %v1450 = vpop.f32.mrb[0].mxu0
        %v1451 = vadd.f32 0.0, %v1450
        %1452 = vmatprep.mubr.f32.mxu0 %v919
        %1453 = vmatmul.mubr.f32.gmra.mrb[0].mxu0 %v918
        %v1454 = vpop.f32.mrb[0].mxu0
        %v1455 = vadd.f32 0.0, %v1454
        %v1456 = vpop.f32.mrb[0].mxu0
        %v1457 = vadd.f32 0.0, %v1456
        %1458 = vmatprep.mubr.f32.mxu0 %v923
        %1459 = vmatmul.mubr.f32.gmra.mrb[0].mxu0 %v922
        %v1460 = vpop.f32.mrb[0].mxu0
        %v1461 = vadd.f32 0.0, %v1460
        %v1462 = vpop.f32.mrb[0].mxu0
        %v1463 = vadd.f32 0.0, %v1462
        %1464 = vmatprep.mubr.f32.mxu0 %v927
        %1465 = vmatmul.mubr.f32.gmra.mrb[0].mxu0 %v926
        %v1466 = vpop.f32.mrb[0].mxu0
        %v1467 = vadd.f32 0.0, %v1466
        %v1468 = vpop.f32.mrb[0].mxu0
        %v1469 = vadd.f32 0.0, %v1468
        %1470 = vmatprep.mubr.f32.mxu0 %v931
        %1471 = vmatmul.mubr.f32.gmra.mrb[0].mxu0 %v930
        %v1472 = vpop.f32.mrb[0].mxu0
        %v1473 = vadd.f32 0.0, %v1472
        %v1474 = vpop.f32.mrb[0].mxu0
        %v1475 = vadd.f32 0.0, %v1474
        %1476 = vmatprep.mubr.f32.mxu0 %v935
        %1477 = vmatmul.mubr.f32.gmra.mrb[0].mxu0 %v934
        %v1478 = vpop.f32.mrb[0].mxu0
        %v1479 = vadd.f32 0.0, %v1478
        %v1480 = vpop.f32.mrb[0].mxu0
        %v1481 = vadd.f32 0.0, %v1480
        %1482 = vmatprep.mubr.f32.mxu0 %v939
        %1483 = vmatmul.mubr.f32.gmra.mrb[0].mxu0 %v938
        %v1484 = vpop.f32.mrb[0].mxu0
        %v1485 = vadd.f32 0.0, %v1484
        %v1486 = vpop.f32.mrb[0].mxu0
        %v1487 = vadd.f32 0.0, %v1486
        %1488 = vmatprep.mubr.f32.mxu0 %v943
        %1489 = vmatmul.mubr.f32.gmra.mrb[0].mxu0 %v942
        %v1490 = vpop.f32.mrb[0].mxu0
        %v1491 = vadd.f32 0.0, %v1490
        %v1492 = vpop.f32.mrb[0].mxu0
        %v1493 = vadd.f32 0.0, %v1492
        %1494 = vmatprep.mubr.f32.mxu0 %v947
        %1495 = vmatmul.mubr.f32.gmra.mrb[0].mxu0 %v946
        %v1496 = vpop.f32.mrb[0].mxu0
        %v1497 = vadd.f32 0.0, %v1496
        %v1498 = vpop.f32.mrb[0].mxu0
        %v1499 = vadd.f32 0.0, %v1498
        %1500 = vmatprep.mubr.f32.mxu0 %v951
        %1501 = vmatmul.mubr.f32.gmra.mrb[0].mxu0 %v950
        %v1502 = vpop.f32.mrb[0].mxu0
        %v1503 = vadd.f32 0.0, %v1502
        %v1504 = vpop.f32.mrb[0].mxu0
        %v1505 = vadd.f32 0.0, %v1504
        %1506 = vmatprep.mubr.f32.mxu0 %v955
        %1507 = vmatmul.mubr.f32.gmra.mrb[0].mxu0 %v954
        %v1508 = vpop.f32.mrb[0].mxu0
        %v1509 = vadd.f32 0.0, %v1508
        %v1510 = vpop.f32.mrb[0].mxu0
        %v1511 = vadd.f32 0.0, %v1510
        %1512 = vmatprep.mubr.f32.mxu0 %v959
        %1513 = vmatmul.mubr.f32.gmra.mrb[0].mxu0 %v958
        %v1514 = vpop.f32.mrb[0].mxu0
        %v1515 = vadd.f32 0.0, %v1514
        %v1516 = vpop.f32.mrb[0].mxu0
        %v1517 = vadd.f32 0.0, %v1516
        %1518 = vmatprep.mubr.f32.mxu0 %v963
        %1519 = vmatmul.mubr.f32.gmra.mrb[0].mxu0 %v962
        %v1520 = vpop.f32.mrb[0].mxu0
        %v1521 = vadd.f32 0.0, %v1520
        %v1522 = vpop.f32.mrb[0].mxu0
        %v1523 = vadd.f32 0.0, %v1522
        %1524 = vmatprep.mubr.f32.mxu0 %v967
        %1525 = vmatmul.mubr.f32.gmra.mrb[0].mxu0 %v966
        %v1526 = vpop.f32.mrb[0].mxu0
        %v1527 = vadd.f32 0.0, %v1526
        %v1528 = vpop.f32.mrb[0].mxu0
        %v1529 = vadd.f32 0.0, %v1528
        %1530 = vmatprep.mubr.f32.mxu0 %v971
        %1531 = vmatmul.mubr.f32.gmra.mrb[0].mxu0 %v970
        %v1532 = vpop.f32.mrb[0].mxu0
        %v1533 = vadd.f32 0.0, %v1532
        %v1534 = vpop.f32.mrb[0].mxu0
        %v1535 = vadd.f32 0.0, %v1534
        %1536 = vmatprep.mubr.f32.mxu0 %v975
        %1537 = vmatmul.mubr.f32.gmra.mrb[0].mxu0 %v974
        %v1538 = vpop.f32.mrb[0].mxu0
        %v1539 = vadd.f32 0.0, %v1538
        %v1540 = vpop.f32.mrb[0].mxu0
        %v1541 = vadd.f32 0.0, %v1540
        %1542 = vmatprep.mubr.f32.mxu0 %v979
        %1543 = vmatmul.mubr.f32.gmra.mrb[0].mxu0 %v978
        %v1544 = vpop.f32.mrb[0].mxu0
        %v1545 = vadd.f32 0.0, %v1544
        %v1546 = vpop.f32.mrb[0].mxu0
        %v1547 = vadd.f32 0.0, %v1546
        %1548 = vmatprep.mubr.f32.mxu0 %v983
        %1549 = vmatmul.mubr.f32.gmra.mrb[0].mxu0 %v982
        %v1550 = vpop.f32.mrb[0].mxu0
        %v1551 = vadd.f32 0.0, %v1550
        %v1552 = vpop.f32.mrb[0].mxu0
        %v1553 = vadd.f32 0.0, %v1552
        %1554 = vmatprep.mubr.f32.mxu0 %v987
        %1555 = vmatmul.mubr.f32.gmra.mrb[0].mxu0 %v986
        %v1556 = vpop.f32.mrb[0].mxu0
        %v1557 = vadd.f32 0.0, %v1556
        %v1558 = vpop.f32.mrb[0].mxu0
        %v1559 = vadd.f32 0.0, %v1558
        %1560 = vdwg.mxu0
        %1561 = vmatprep.subr.mxu0 %v993
        %1562 = vmatpush1.xpose.msra.mxu0 %v992
        %1563 = vmatprep.subr.mxu0 %v997
        %1564 = vmatpush1.xpose.msra.mxu0 %v996
        %1565 = vmatprep.subr.mxu0 %v1001
        %1566 = vmatpush1.xpose.msra.mxu0 %v1000
        %1567 = vmatprep.subr.mxu0 %v1005
        %1568 = vmatpush1.xpose.msra.mxu0 %v1004
        %1569 = vmatprep.subr.mxu0 %v1009
        %1570 = vmatpush1.xpose.msra.mxu0 %v1008
        %1571 = vmatprep.subr.mxu0 %v1013
        %1572 = vmatpush1.xpose.msra.mxu0 %v1012
        %1573 = vmatprep.subr.mxu0 %v1017
        %1574 = vmatpush1.xpose.msra.mxu0 %v1016
        %1575 = vmatprep.subr.mxu0 %v1021
        %1576 = vmatpush1.xpose.msra.mxu0 %v1020
        %1577 = vmatprep.subr.mxu0 %v1025
        %1578 = vmatpush1.xpose.msra.mxu0 %v1024
        %1579 = vmatprep.subr.mxu0 %v1029
        %1580 = vmatpush1.xpose.msra.mxu0 %v1028
        %1581 = vmatprep.subr.mxu0 %v1033
        %1582 = vmatpush1.xpose.msra.mxu0 %v1032
        %1583 = vmatprep.subr.mxu0 %v1037
        %1584 = vmatpush1.xpose.msra.mxu0 %v1036
        %1585 = vmatprep.subr.mxu0 %v1041
        %1586 = vmatpush1.xpose.msra.mxu0 %v1040
        %1587 = vmatprep.subr.mxu0 %v1045
        %1588 = vmatpush1.xpose.msra.mxu0 %v1044
        %1589 = vmatprep.subr.mxu0 %v1049
        %1590 = vmatpush1.xpose.msra.mxu0 %v1048
        %1591 = vmatprep.subr.mxu0 %v1053
        %1592 = vmatpush1.xpose.msra.mxu0 %v1052
        %1593 = vmatprep.subr.mxu0 %v1057
        %1594 = vmatpush1.xpose.msra.mxu0 %v1056
        %1595 = vmatprep.subr.mxu0 %v1061
        %1596 = vmatpush1.xpose.msra.mxu0 %v1060
        %1597 = vmatprep.subr.mxu0 %v1065
        %1598 = vmatpush1.xpose.msra.mxu0 %v1064
        %1599 = vmatprep.subr.mxu0 %v1069
        %1600 = vmatpush1.xpose.msra.mxu0 %v1068
        %1601 = vmatprep.subr.mxu0 %v1073
        %1602 = vmatpush1.xpose.msra.mxu0 %v1072
        %1603 = vmatprep.subr.mxu0 %v1077
        %1604 = vmatpush1.xpose.msra.mxu0 %v1076
        %1605 = vmatprep.subr.mxu0 %v1081
        %1606 = vmatpush1.xpose.msra.mxu0 %v1080
        %1607 = vmatprep.subr.mxu0 %v1085
        %1608 = vmatpush1.xpose.msra.mxu0 %v1084
        %1609 = vmatprep.subr.mxu0 %v1089
        %1610 = vmatpush1.xpose.msra.mxu0 %v1088
        %1611 = vmatprep.subr.mxu0 %v1093
        %1612 = vmatpush1.xpose.msra.mxu0 %v1092
        %1613 = vmatprep.subr.mxu0 %v1097
        %1614 = vmatpush1.xpose.msra.mxu0 %v1096
        %1615 = vmatprep.subr.mxu0 %v1101
        %1616 = vmatpush1.xpose.msra.mxu0 %v1100
        %1617 = vmatprep.subr.mxu0 %v1105
        %1618 = vmatpush1.xpose.msra.mxu0 %v1104
        %1619 = vmatprep.subr.mxu0 %v1109
        %1620 = vmatpush1.xpose.msra.mxu0 %v1108
        %1621 = vmatprep.subr.mxu0 %v1113
        %1622 = vmatpush1.xpose.msra.mxu0 %v1112
        %1623 = vmatprep.subr.mxu0 %v1117
        %1624 = vmatpush1.xpose.msra.mxu0 %v1116
        %1625 = vmatprep.mubr.f32.mxu0 %v893
        %1626 = vmatmul.mubr.f32.gmra.mrb[0].mxu0 %v892
        %v1627 = vpop.f32.mrb[0].mxu0
        %v1628 = vadd.f32 %v1413, %v1627
        %v1629 = vpop.f32.mrb[0].mxu0
        %v1630 = vadd.f32 %v1415, %v1629
        %1631 = vmatprep.mubr.f32.mxu0 %v897
        %1632 = vmatmul.mubr.f32.gmra.mrb[0].mxu0 %v896
        %v1633 = vpop.f32.mrb[0].mxu0
        %v1634 = vadd.f32 %v1419, %v1633
        %v1635 = vpop.f32.mrb[0].mxu0
        %v1636 = vadd.f32 %v1421, %v1635
        %1637 = vmatprep.mubr.f32.mxu0 %v901
        %1638 = vmatmul.mubr.f32.gmra.mrb[0].mxu0 %v900
        %v1639 = vpop.f32.mrb[0].mxu0
        %v1640 = vadd.f32 %v1425, %v1639
        %v1641 = vpop.f32.mrb[0].mxu0
        %v1642 = vadd.f32 %v1427, %v1641
        %1643 = vmatprep.mubr.f32.mxu0 %v905
        %1644 = vmatmul.mubr.f32.gmra.mrb[0].mxu0 %v904
        %v1645 = vpop.f32.mrb[0].mxu0
        %v1646 = vadd.f32 %v1431, %v1645
        %v1647 = vpop.f32.mrb[0].mxu0
        %v1648 = vadd.f32 %v1433, %v1647
        %1649 = vmatprep.mubr.f32.mxu0 %v909
        %1650 = vmatmul.mubr.f32.gmra.mrb[0].mxu0 %v908
        %v1651 = vpop.f32.mrb[0].mxu0
        %v1652 = vadd.f32 %v1437, %v1651
        %v1653 = vpop.f32.mrb[0].mxu0
        %v1654 = vadd.f32 %v1439, %v1653
        %1655 = vmatprep.mubr.f32.mxu0 %v913
        %1656 = vmatmul.mubr.f32.gmra.mrb[0].mxu0 %v912
        %v1657 = vpop.f32.mrb[0].mxu0
        %v1658 = vadd.f32 %v1443, %v1657
        %v1659 = vpop.f32.mrb[0].mxu0
        %v1660 = vadd.f32 %v1445, %v1659
        %1661 = vmatprep.mubr.f32.mxu0 %v917
        %1662 = vmatmul.mubr.f32.gmra.mrb[0].mxu0 %v916
        %v1663 = vpop.f32.mrb[0].mxu0
        %v1664 = vadd.f32 %v1449, %v1663
        %v1665 = vpop.f32.mrb[0].mxu0
        %v1666 = vadd.f32 %v1451, %v1665
        %1667 = vmatprep.mubr.f32.mxu0 %v921
        %1668 = vmatmul.mubr.f32.gmra.mrb[0].mxu0 %v920
        %v1669 = vpop.f32.mrb[0].mxu0
        %v1670 = vadd.f32 %v1455, %v1669
        %v1671 = vpop.f32.mrb[0].mxu0
        %v1672 = vadd.f32 %v1457, %v1671
        %1673 = vmatprep.mubr.f32.mxu0 %v925
        %1674 = vmatmul.mubr.f32.gmra.mrb[0].mxu0 %v924
        %v1675 = vpop.f32.mrb[0].mxu0
        %v1676 = vadd.f32 %v1461, %v1675
        %v1677 = vpop.f32.mrb[0].mxu0
        %v1678 = vadd.f32 %v1463, %v1677
        %1679 = vmatprep.mubr.f32.mxu0 %v929
        %1680 = vmatmul.mubr.f32.gmra.mrb[0].mxu0 %v928
        %v1681 = vpop.f32.mrb[0].mxu0
        %v1682 = vadd.f32 %v1467, %v1681
        %v1683 = vpop.f32.mrb[0].mxu0
        %v1684 = vadd.f32 %v1469, %v1683
        %1685 = vmatprep.mubr.f32.mxu0 %v933
        %1686 = vmatmul.mubr.f32.gmra.mrb[0].mxu0 %v932
        %v1687 = vpop.f32.mrb[0].mxu0
        %v1688 = vadd.f32 %v1473, %v1687
        %v1689 = vpop.f32.mrb[0].mxu0
        %v1690 = vadd.f32 %v1475, %v1689
        %1691 = vmatprep.mubr.f32.mxu0 %v937
        %1692 = vmatmul.mubr.f32.gmra.mrb[0].mxu0 %v936
        %v1693 = vpop.f32.mrb[0].mxu0
        %v1694 = vadd.f32 %v1479, %v1693
        %v1695 = vpop.f32.mrb[0].mxu0
        %v1696 = vadd.f32 %v1481, %v1695
        %1697 = vmatprep.mubr.f32.mxu0 %v941
        %1698 = vmatmul.mubr.f32.gmra.mrb[0].mxu0 %v940
        %v1699 = vpop.f32.mrb[0].mxu0
        %v1700 = vadd.f32 %v1485, %v1699
        %v1701 = vpop.f32.mrb[0].mxu0
        %v1702 = vadd.f32 %v1487, %v1701
        %1703 = vmatprep.mubr.f32.mxu0 %v945
        %1704 = vmatmul.mubr.f32.gmra.mrb[0].mxu0 %v944
        %v1705 = vpop.f32.mrb[0].mxu0
        %v1706 = vadd.f32 %v1491, %v1705
        %v1707 = vpop.f32.mrb[0].mxu0
        %v1708 = vadd.f32 %v1493, %v1707
        %1709 = vmatprep.mubr.f32.mxu0 %v949
        %1710 = vmatmul.mubr.f32.gmra.mrb[0].mxu0 %v948
        %v1711 = vpop.f32.mrb[0].mxu0
        %v1712 = vadd.f32 %v1497, %v1711
        %v1713 = vpop.f32.mrb[0].mxu0
        %v1714 = vadd.f32 %v1499, %v1713
        %1715 = vmatprep.mubr.f32.mxu0 %v953
        %1716 = vmatmul.mubr.f32.gmra.mrb[0].mxu0 %v952
        %v1717 = vpop.f32.mrb[0].mxu0
        %v1718 = vadd.f32 %v1503, %v1717
        %v1719 = vpop.f32.mrb[0].mxu0
        %v1720 = vadd.f32 %v1505, %v1719
        %1721 = vmatprep.mubr.f32.mxu0 %v957
        %1722 = vmatmul.mubr.f32.gmra.mrb[0].mxu0 %v956
        %v1723 = vpop.f32.mrb[0].mxu0
        %v1724 = vadd.f32 %v1509, %v1723
        %v1725 = vpop.f32.mrb[0].mxu0
        %v1726 = vadd.f32 %v1511, %v1725
        %1727 = vmatprep.mubr.f32.mxu0 %v961
        %1728 = vmatmul.mubr.f32.gmra.mrb[0].mxu0 %v960
        %v1729 = vpop.f32.mrb[0].mxu0
        %v1730 = vadd.f32 %v1515, %v1729
        %v1731 = vpop.f32.mrb[0].mxu0
        %v1732 = vadd.f32 %v1517, %v1731
        %1733 = vmatprep.mubr.f32.mxu0 %v965
        %1734 = vmatmul.mubr.f32.gmra.mrb[0].mxu0 %v964
        %v1735 = vpop.f32.mrb[0].mxu0
        %v1736 = vadd.f32 %v1521, %v1735
        %v1737 = vpop.f32.mrb[0].mxu0
        %v1738 = vadd.f32 %v1523, %v1737
        %1739 = vmatprep.mubr.f32.mxu0 %v969
        %1740 = vmatmul.mubr.f32.gmra.mrb[0].mxu0 %v968
        %v1741 = vpop.f32.mrb[0].mxu0
        %v1742 = vadd.f32 %v1527, %v1741
        %v1743 = vpop.f32.mrb[0].mxu0
        %v1744 = vadd.f32 %v1529, %v1743
        %1745 = vmatprep.mubr.f32.mxu0 %v973
        %1746 = vmatmul.mubr.f32.gmra.mrb[0].mxu0 %v972
        %v1747 = vpop.f32.mrb[0].mxu0
        %v1748 = vadd.f32 %v1533, %v1747
        %v1749 = vpop.f32.mrb[0].mxu0
        %v1750 = vadd.f32 %v1535, %v1749
        %1751 = vmatprep.mubr.f32.mxu0 %v977
        %1752 = vmatmul.mubr.f32.gmra.mrb[0].mxu0 %v976
        %v1753 = vpop.f32.mrb[0].mxu0
        %v1754 = vadd.f32 %v1539, %v1753
        %v1755 = vpop.f32.mrb[0].mxu0
        %v1756 = vadd.f32 %v1541, %v1755
        %1757 = vmatprep.mubr.f32.mxu0 %v981
        %1758 = vmatmul.mubr.f32.gmra.mrb[0].mxu0 %v980
        %v1759 = vpop.f32.mrb[0].mxu0
        %v1760 = vadd.f32 %v1545, %v1759
        %v1761 = vpop.f32.mrb[0].mxu0
        %v1762 = vadd.f32 %v1547, %v1761
        %1763 = vmatprep.mubr.f32.mxu0 %v985
        %1764 = vmatmul.mubr.f32.gmra.mrb[0].mxu0 %v984
        %v1765 = vpop.f32.mrb[0].mxu0
        %v1766 = vadd.f32 %v1551, %v1765
        %v1767 = vpop.f32.mrb[0].mxu0
        %v1768 = vadd.f32 %v1553, %v1767
        %1769 = vmatprep.mubr.f32.mxu0 %v989
        %1770 = vmatmul.mubr.f32.gmra.mrb[0].mxu0 %v988
        %v1771 = vpop.f32.mrb[0].mxu0
        %v1772 = vadd.f32 %v1557, %v1771
        %v1773 = vpop.f32.mrb[0].mxu0
        %v1774 = vadd.f32 %v1559, %v1773
        %1775 = vdwg.mxu0
        %1776 = vmatprep.subr.mxu0 %v1119
        %1777 = vmatpush1.xpose.msra.mxu0 %v1118
        %1778 = vmatprep.subr.mxu0 %v1123
        %1779 = vmatpush1.xpose.msra.mxu0 %v1122
        %1780 = vmatprep.subr.mxu0 %v1127
        %1781 = vmatpush1.xpose.msra.mxu0 %v1126
        %1782 = vmatprep.subr.mxu0 %v1131
        %1783 = vmatpush1.xpose.msra.mxu0 %v1130
        %1784 = vmatprep.subr.mxu0 %v1135
        %1785 = vmatpush1.xpose.msra.mxu0 %v1134
        %1786 = vmatprep.subr.mxu0 %v1139
        %1787 = vmatpush1.xpose.msra.mxu0 %v1138
        %1788 = vmatprep.subr.mxu0 %v1143
        %1789 = vmatpush1.xpose.msra.mxu0 %v1142
        %1790 = vmatprep.subr.mxu0 %v1147
        %1791 = vmatpush1.xpose.msra.mxu0 %v1146
        %1792 = vmatprep.subr.mxu0 %v1151
        %1793 = vmatpush1.xpose.msra.mxu0 %v1150
        %1794 = vmatprep.subr.mxu0 %v1155
        %1795 = vmatpush1.xpose.msra.mxu0 %v1154
        %1796 = vmatprep.subr.mxu0 %v1159
        %1797 = vmatpush1.xpose.msra.mxu0 %v1158
        %1798 = vmatprep.subr.mxu0 %v1163
        %1799 = vmatpush1.xpose.msra.mxu0 %v1162
        %1800 = vmatprep.subr.mxu0 %v1167
        %1801 = vmatpush1.xpose.msra.mxu0 %v1166
        %1802 = vmatprep.subr.mxu0 %v1171
        %1803 = vmatpush1.xpose.msra.mxu0 %v1170
        %1804 = vmatprep.subr.mxu0 %v1175
        %1805 = vmatpush1.xpose.msra.mxu0 %v1174
        %1806 = vmatprep.subr.mxu0 %v1179
        %1807 = vmatpush1.xpose.msra.mxu0 %v1178
        %1808 = vmatprep.subr.mxu0 %v1183
        %1809 = vmatpush1.xpose.msra.mxu0 %v1182
        %1810 = vmatprep.subr.mxu0 %v1187
        %1811 = vmatpush1.xpose.msra.mxu0 %v1186
        %1812 = vmatprep.subr.mxu0 %v1191
        %1813 = vmatpush1.xpose.msra.mxu0 %v1190
        %1814 = vmatprep.subr.mxu0 %v1195
        %1815 = vmatpush1.xpose.msra.mxu0 %v1194
        %1816 = vmatprep.subr.mxu0 %v1199
        %1817 = vmatpush1.xpose.msra.mxu0 %v1198
        %1818 = vmatprep.subr.mxu0 %v1203
        %1819 = vmatpush1.xpose.msra.mxu0 %v1202
        %1820 = vmatprep.subr.mxu0 %v1207
        %1821 = vmatpush1.xpose.msra.mxu0 %v1206
        %1822 = vmatprep.subr.mxu0 %v1211
        %1823 = vmatpush1.xpose.msra.mxu0 %v1210
        %1824 = vmatprep.subr.mxu0 %v1215
        %1825 = vmatpush1.xpose.msra.mxu0 %v1214
        %1826 = vmatprep.subr.mxu0 %v1219
        %1827 = vmatpush1.xpose.msra.mxu0 %v1218
        %1828 = vmatprep.subr.mxu0 %v1223
        %1829 = vmatpush1.xpose.msra.mxu0 %v1222
        %1830 = vmatprep.subr.mxu0 %v1227
        %1831 = vmatpush1.xpose.msra.mxu0 %v1226
        %1832 = vmatprep.subr.mxu0 %v1231
        %1833 = vmatpush1.xpose.msra.mxu0 %v1230
        %1834 = vmatprep.subr.mxu0 %v1235
        %1835 = vmatpush1.xpose.msra.mxu0 %v1234
        %1836 = vmatprep.subr.mxu0 %v1239
        %1837 = vmatpush1.xpose.msra.mxu0 %v1238
        %1838 = vmatprep.subr.mxu0 %v1243
        %1839 = vmatpush1.xpose.msra.mxu0 %v1242
        %1840 = vmatprep.mubr.f32.mxu0 %v891
        %1841 = vmatmul.mubr.f32.gmra.mrb[0].mxu0 %v890
        %v1842 = vpop.f32.mrb[0].mxu0
        %v1843 = vadd.f32 0.0, %v1842
        %v1844 = vpop.f32.mrb[0].mxu0
        %v1845 = vadd.f32 0.0, %v1844
        %1846 = vmatprep.mubr.f32.mxu0 %v895
        %1847 = vmatmul.mubr.f32.gmra.mrb[0].mxu0 %v894
        %v1848 = vpop.f32.mrb[0].mxu0
        %v1849 = vadd.f32 0.0, %v1848
        %v1850 = vpop.f32.mrb[0].mxu0
        %v1851 = vadd.f32 0.0, %v1850
        %1852 = vmatprep.mubr.f32.mxu0 %v899
        %1853 = vmatmul.mubr.f32.gmra.mrb[0].mxu0 %v898
        %v1854 = vpop.f32.mrb[0].mxu0
        %v1855 = vadd.f32 0.0, %v1854
        %v1856 = vpop.f32.mrb[0].mxu0
        %v1857 = vadd.f32 0.0, %v1856
        %1858 = vmatprep.mubr.f32.mxu0 %v903
        %1859 = vmatmul.mubr.f32.gmra.mrb[0].mxu0 %v902
        %v1860 = vpop.f32.mrb[0].mxu0
        %v1861 = vadd.f32 0.0, %v1860
        %v1862 = vpop.f32.mrb[0].mxu0
        %v1863 = vadd.f32 0.0, %v1862
        %1864 = vmatprep.mubr.f32.mxu0 %v907
        %1865 = vmatmul.mubr.f32.gmra.mrb[0].mxu0 %v906
        %v1866 = vpop.f32.mrb[0].mxu0
        %v1867 = vadd.f32 0.0, %v1866
        %v1868 = vpop.f32.mrb[0].mxu0
        %v1869 = vadd.f32 0.0, %v1868
        %1870 = vmatprep.mubr.f32.mxu0 %v911
        %1871 = vmatmul.mubr.f32.gmra.mrb[0].mxu0 %v910
        %v1872 = vpop.f32.mrb[0].mxu0
        %v1873 = vadd.f32 0.0, %v1872
        %v1874 = vpop.f32.mrb[0].mxu0
        %v1875 = vadd.f32 0.0, %v1874
        %1876 = vmatprep.mubr.f32.mxu0 %v915
        %1877 = vmatmul.mubr.f32.gmra.mrb[0].mxu0 %v914
        %v1878 = vpop.f32.mrb[0].mxu0
        %v1879 = vadd.f32 0.0, %v1878
        %v1880 = vpop.f32.mrb[0].mxu0
        %v1881 = vadd.f32 0.0, %v1880
        %1882 = vmatprep.mubr.f32.mxu0 %v919
        %1883 = vmatmul.mubr.f32.gmra.mrb[0].mxu0 %v918
        %v1884 = vpop.f32.mrb[0].mxu0
        %v1885 = vadd.f32 0.0, %v1884
        %v1886 = vpop.f32.mrb[0].mxu0
        %v1887 = vadd.f32 0.0, %v1886
        %1888 = vmatprep.mubr.f32.mxu0 %v923
        %1889 = vmatmul.mubr.f32.gmra.mrb[0].mxu0 %v922
        %v1890 = vpop.f32.mrb[0].mxu0
        %v1891 = vadd.f32 0.0, %v1890
        %v1892 = vpop.f32.mrb[0].mxu0
        %v1893 = vadd.f32 0.0, %v1892
        %1894 = vmatprep.mubr.f32.mxu0 %v927
        %1895 = vmatmul.mubr.f32.gmra.mrb[0].mxu0 %v926
        %v1896 = vpop.f32.mrb[0].mxu0
        %v1897 = vadd.f32 0.0, %v1896
        %v1898 = vpop.f32.mrb[0].mxu0
        %v1899 = vadd.f32 0.0, %v1898
        %1900 = vmatprep.mubr.f32.mxu0 %v931
        %1901 = vmatmul.mubr.f32.gmra.mrb[0].mxu0 %v930
        %v1902 = vpop.f32.mrb[0].mxu0
        %v1903 = vadd.f32 0.0, %v1902
        %v1904 = vpop.f32.mrb[0].mxu0
        %v1905 = vadd.f32 0.0, %v1904
        %1906 = vmatprep.mubr.f32.mxu0 %v935
        %1907 = vmatmul.mubr.f32.gmra.mrb[0].mxu0 %v934
        %v1908 = vpop.f32.mrb[0].mxu0
        %v1909 = vadd.f32 0.0, %v1908
        %v1910 = vpop.f32.mrb[0].mxu0
        %v1911 = vadd.f32 0.0, %v1910
        %1912 = vmatprep.mubr.f32.mxu0 %v939
        %1913 = vmatmul.mubr.f32.gmra.mrb[0].mxu0 %v938
        %v1914 = vpop.f32.mrb[0].mxu0
        %v1915 = vadd.f32 0.0, %v1914
        %v1916 = vpop.f32.mrb[0].mxu0
        %v1917 = vadd.f32 0.0, %v1916
        %1918 = vmatprep.mubr.f32.mxu0 %v943
        %1919 = vmatmul.mubr.f32.gmra.mrb[0].mxu0 %v942
        %v1920 = vpop.f32.mrb[0].mxu0
        %v1921 = vadd.f32 0.0, %v1920
        %v1922 = vpop.f32.mrb[0].mxu0
        %v1923 = vadd.f32 0.0, %v1922
        %1924 = vmatprep.mubr.f32.mxu0 %v947
        %1925 = vmatmul.mubr.f32.gmra.mrb[0].mxu0 %v946
        %v1926 = vpop.f32.mrb[0].mxu0
        %v1927 = vadd.f32 0.0, %v1926
        %v1928 = vpop.f32.mrb[0].mxu0
        %v1929 = vadd.f32 0.0, %v1928
        %1930 = vmatprep.mubr.f32.mxu0 %v951
        %1931 = vmatmul.mubr.f32.gmra.mrb[0].mxu0 %v950
        %v1932 = vpop.f32.mrb[0].mxu0
        %v1933 = vadd.f32 0.0, %v1932
        %v1934 = vpop.f32.mrb[0].mxu0
        %v1935 = vadd.f32 0.0, %v1934
        %1936 = vmatprep.mubr.f32.mxu0 %v955
        %1937 = vmatmul.mubr.f32.gmra.mrb[0].mxu0 %v954
        %v1938 = vpop.f32.mrb[0].mxu0
        %v1939 = vadd.f32 0.0, %v1938
        %v1940 = vpop.f32.mrb[0].mxu0
        %v1941 = vadd.f32 0.0, %v1940
        %1942 = vmatprep.mubr.f32.mxu0 %v959
        %1943 = vmatmul.mubr.f32.gmra.mrb[0].mxu0 %v958
        %v1944 = vpop.f32.mrb[0].mxu0
        %v1945 = vadd.f32 0.0, %v1944
        %v1946 = vpop.f32.mrb[0].mxu0
        %v1947 = vadd.f32 0.0, %v1946
        %1948 = vmatprep.mubr.f32.mxu0 %v963
        %1949 = vmatmul.mubr.f32.gmra.mrb[0].mxu0 %v962
        %v1950 = vpop.f32.mrb[0].mxu0
        %v1951 = vadd.f32 0.0, %v1950
        %v1952 = vpop.f32.mrb[0].mxu0
        %v1953 = vadd.f32 0.0, %v1952
        %1954 = vmatprep.mubr.f32.mxu0 %v967
        %1955 = vmatmul.mubr.f32.gmra.mrb[0].mxu0 %v966
        %v1956 = vpop.f32.mrb[0].mxu0
        %v1957 = vadd.f32 0.0, %v1956
        %v1958 = vpop.f32.mrb[0].mxu0
        %v1959 = vadd.f32 0.0, %v1958
        %1960 = vmatprep.mubr.f32.mxu0 %v971
        %1961 = vmatmul.mubr.f32.gmra.mrb[0].mxu0 %v970
        %v1962 = vpop.f32.mrb[0].mxu0
        %v1963 = vadd.f32 0.0, %v1962
        %v1964 = vpop.f32.mrb[0].mxu0
        %v1965 = vadd.f32 0.0, %v1964
        %1966 = vmatprep.mubr.f32.mxu0 %v975
        %1967 = vmatmul.mubr.f32.gmra.mrb[0].mxu0 %v974
        %v1968 = vpop.f32.mrb[0].mxu0
        %v1969 = vadd.f32 0.0, %v1968
        %v1970 = vpop.f32.mrb[0].mxu0
        %v1971 = vadd.f32 0.0, %v1970
        %1972 = vmatprep.mubr.f32.mxu0 %v979
        %1973 = vmatmul.mubr.f32.gmra.mrb[0].mxu0 %v978
        %v1974 = vpop.f32.mrb[0].mxu0
        %v1975 = vadd.f32 0.0, %v1974
        %v1976 = vpop.f32.mrb[0].mxu0
        %v1977 = vadd.f32 0.0, %v1976
        %1978 = vmatprep.mubr.f32.mxu0 %v983
        %1979 = vmatmul.mubr.f32.gmra.mrb[0].mxu0 %v982
        %v1980 = vpop.f32.mrb[0].mxu0
        %v1981 = vadd.f32 0.0, %v1980
        %v1982 = vpop.f32.mrb[0].mxu0
        %v1983 = vadd.f32 0.0, %v1982
        %1984 = vmatprep.mubr.f32.mxu0 %v987
        %1985 = vmatmul.mubr.f32.gmra.mrb[0].mxu0 %v986
        %v1986 = vpop.f32.mrb[0].mxu0
        %v1987 = vadd.f32 0.0, %v1986
        %v1988 = vpop.f32.mrb[0].mxu0
        %v1989 = vadd.f32 0.0, %v1988
        %1990 = vdwg.mxu0
        %1991 = vmatprep.subr.mxu0 %v1121
        %1992 = vmatpush1.xpose.msra.mxu0 %v1120
        %1993 = vmatprep.subr.mxu0 %v1125
        %1994 = vmatpush1.xpose.msra.mxu0 %v1124
        %1995 = vmatprep.subr.mxu0 %v1129
        %1996 = vmatpush1.xpose.msra.mxu0 %v1128
        %1997 = vmatprep.subr.mxu0 %v1133
        %1998 = vmatpush1.xpose.msra.mxu0 %v1132
        %1999 = vmatprep.subr.mxu0 %v1137
        %2000 = vmatpush1.xpose.msra.mxu0 %v1136
        %2001 = vmatprep.subr.mxu0 %v1141
        %2002 = vmatpush1.xpose.msra.mxu0 %v1140
        %2003 = vmatprep.subr.mxu0 %v1145
        %2004 = vmatpush1.xpose.msra.mxu0 %v1144
        %2005 = vmatprep.subr.mxu0 %v1149
        %2006 = vmatpush1.xpose.msra.mxu0 %v1148
        %2007 = vmatprep.subr.mxu0 %v1153
        %2008 = vmatpush1.xpose.msra.mxu0 %v1152
        %2009 = vmatprep.subr.mxu0 %v1157
        %2010 = vmatpush1.xpose.msra.mxu0 %v1156
        %2011 = vmatprep.subr.mxu0 %v1161
        %2012 = vmatpush1.xpose.msra.mxu0 %v1160
        %2013 = vmatprep.subr.mxu0 %v1165
        %2014 = vmatpush1.xpose.msra.mxu0 %v1164
        %2015 = vmatprep.subr.mxu0 %v1169
        %2016 = vmatpush1.xpose.msra.mxu0 %v1168
        %2017 = vmatprep.subr.mxu0 %v1173
        %2018 = vmatpush1.xpose.msra.mxu0 %v1172
        %2019 = vmatprep.subr.mxu0 %v1177
        %2020 = vmatpush1.xpose.msra.mxu0 %v1176
        %2021 = vmatprep.subr.mxu0 %v1181
        %2022 = vmatpush1.xpose.msra.mxu0 %v1180
        %2023 = vmatprep.subr.mxu0 %v1185
        %2024 = vmatpush1.xpose.msra.mxu0 %v1184
        %2025 = vmatprep.subr.mxu0 %v1189
        %2026 = vmatpush1.xpose.msra.mxu0 %v1188
        %2027 = vmatprep.subr.mxu0 %v1193
        %2028 = vmatpush1.xpose.msra.mxu0 %v1192
        %2029 = vmatprep.subr.mxu0 %v1197
        %2030 = vmatpush1.xpose.msra.mxu0 %v1196
        %2031 = vmatprep.subr.mxu0 %v1201
        %2032 = vmatpush1.xpose.msra.mxu0 %v1200
        %2033 = vmatprep.subr.mxu0 %v1205
        %2034 = vmatpush1.xpose.msra.mxu0 %v1204
        %2035 = vmatprep.subr.mxu0 %v1209
        %2036 = vmatpush1.xpose.msra.mxu0 %v1208
        %2037 = vmatprep.subr.mxu0 %v1213
        %2038 = vmatpush1.xpose.msra.mxu0 %v1212
        %2039 = vmatprep.subr.mxu0 %v1217
        %2040 = vmatpush1.xpose.msra.mxu0 %v1216
        %2041 = vmatprep.subr.mxu0 %v1221
        %2042 = vmatpush1.xpose.msra.mxu0 %v1220
        %2043 = vmatprep.subr.mxu0 %v1225
        %2044 = vmatpush1.xpose.msra.mxu0 %v1224
        %2045 = vmatprep.subr.mxu0 %v1229
        %2046 = vmatpush1.xpose.msra.mxu0 %v1228
        %2047 = vmatprep.subr.mxu0 %v1233
        %2048 = vmatpush1.xpose.msra.mxu0 %v1232
        %2049 = vmatprep.subr.mxu0 %v1237
        %2050 = vmatpush1.xpose.msra.mxu0 %v1236
        %2051 = vmatprep.subr.mxu0 %v1241
        %2052 = vmatpush1.xpose.msra.mxu0 %v1240
        %2053 = vmatprep.subr.mxu0 %v1245
        %2054 = vmatpush1.xpose.msra.mxu0 %v1244
        %2055 = vmatprep.mubr.f32.mxu0 %v893
        %2056 = vmatmul.mubr.f32.gmra.mrb[0].mxu0 %v892
        %v2057 = vpop.f32.mrb[0].mxu0
        %v2058 = vadd.f32 %v1843, %v2057
        %v2059 = vpop.f32.mrb[0].mxu0
        %v2060 = vadd.f32 %v1845, %v2059
        %2061 = vmatprep.mubr.f32.mxu0 %v897
        %2062 = vmatmul.mubr.f32.gmra.mrb[0].mxu0 %v896
        %v2063 = vpop.f32.mrb[0].mxu0
        %v2064 = vadd.f32 %v1849, %v2063
        %v2065 = vpop.f32.mrb[0].mxu0
        %v2066 = vadd.f32 %v1851, %v2065
        %2067 = vmatprep.mubr.f32.mxu0 %v901
        %2068 = vmatmul.mubr.f32.gmra.mrb[0].mxu0 %v900
        %v2069 = vpop.f32.mrb[0].mxu0
        %v2070 = vadd.f32 %v1855, %v2069
        %v2071 = vpop.f32.mrb[0].mxu0
        %v2072 = vadd.f32 %v1857, %v2071
        %2073 = vmatprep.mubr.f32.mxu0 %v905
        %2074 = vmatmul.mubr.f32.gmra.mrb[0].mxu0 %v904
        %v2075 = vpop.f32.mrb[0].mxu0
        %v2076 = vadd.f32 %v1861, %v2075
        %v2077 = vpop.f32.mrb[0].mxu0
        %v2078 = vadd.f32 %v1863, %v2077
        %2079 = vmatprep.mubr.f32.mxu0 %v909
        %2080 = vmatmul.mubr.f32.gmra.mrb[0].mxu0 %v908
        %v2081 = vpop.f32.mrb[0].mxu0
        %v2082 = vadd.f32 %v1867, %v2081
        %v2083 = vpop.f32.mrb[0].mxu0
        %v2084 = vadd.f32 %v1869, %v2083
        %2085 = vmatprep.mubr.f32.mxu0 %v913
        %2086 = vmatmul.mubr.f32.gmra.mrb[0].mxu0 %v912
        %v2087 = vpop.f32.mrb[0].mxu0
        %v2088 = vadd.f32 %v1873, %v2087
        %v2089 = vpop.f32.mrb[0].mxu0
        %v2090 = vadd.f32 %v1875, %v2089
        %2091 = vmatprep.mubr.f32.mxu0 %v917
        %2092 = vmatmul.mubr.f32.gmra.mrb[0].mxu0 %v916
        %v2093 = vpop.f32.mrb[0].mxu0
        %v2094 = vadd.f32 %v1879, %v2093
        %v2095 = vpop.f32.mrb[0].mxu0
        %v2096 = vadd.f32 %v1881, %v2095
        %2097 = vmatprep.mubr.f32.mxu0 %v921
        %2098 = vmatmul.mubr.f32.gmra.mrb[0].mxu0 %v920
        %v2099 = vpop.f32.mrb[0].mxu0
        %v2100 = vadd.f32 %v1885, %v2099
        %v2101 = vpop.f32.mrb[0].mxu0
        %v2102 = vadd.f32 %v1887, %v2101
        %2103 = vmatprep.mubr.f32.mxu0 %v925
        %2104 = vmatmul.mubr.f32.gmra.mrb[0].mxu0 %v924
        %v2105 = vpop.f32.mrb[0].mxu0
        %v2106 = vadd.f32 %v1891, %v2105
        %v2107 = vpop.f32.mrb[0].mxu0
        %v2108 = vadd.f32 %v1893, %v2107
        %2109 = vmatprep.mubr.f32.mxu0 %v929
        %2110 = vmatmul.mubr.f32.gmra.mrb[0].mxu0 %v928
        %v2111 = vpop.f32.mrb[0].mxu0
        %v2112 = vadd.f32 %v1897, %v2111
        %v2113 = vpop.f32.mrb[0].mxu0
        %v2114 = vadd.f32 %v1899, %v2113
        %2115 = vmatprep.mubr.f32.mxu0 %v933
        %2116 = vmatmul.mubr.f32.gmra.mrb[0].mxu0 %v932
        %v2117 = vpop.f32.mrb[0].mxu0
        %v2118 = vadd.f32 %v1903, %v2117
        %v2119 = vpop.f32.mrb[0].mxu0
        %v2120 = vadd.f32 %v1905, %v2119
        %2121 = vmatprep.mubr.f32.mxu0 %v937
        %2122 = vmatmul.mubr.f32.gmra.mrb[0].mxu0 %v936
        %v2123 = vpop.f32.mrb[0].mxu0
        %v2124 = vadd.f32 %v1909, %v2123
        %v2125 = vpop.f32.mrb[0].mxu0
        %v2126 = vadd.f32 %v1911, %v2125
        %2127 = vmatprep.mubr.f32.mxu0 %v941
        %2128 = vmatmul.mubr.f32.gmra.mrb[0].mxu0 %v940
        %v2129 = vpop.f32.mrb[0].mxu0
        %v2130 = vadd.f32 %v1915, %v2129
        %v2131 = vpop.f32.mrb[0].mxu0
        %v2132 = vadd.f32 %v1917, %v2131
        %2133 = vmatprep.mubr.f32.mxu0 %v945
        %2134 = vmatmul.mubr.f32.gmra.mrb[0].mxu0 %v944
        %v2135 = vpop.f32.mrb[0].mxu0
        %v2136 = vadd.f32 %v1921, %v2135
        %v2137 = vpop.f32.mrb[0].mxu0
        %v2138 = vadd.f32 %v1923, %v2137
        %2139 = vmatprep.mubr.f32.mxu0 %v949
        %2140 = vmatmul.mubr.f32.gmra.mrb[0].mxu0 %v948
        %v2141 = vpop.f32.mrb[0].mxu0
        %v2142 = vadd.f32 %v1927, %v2141
        %v2143 = vpop.f32.mrb[0].mxu0
        %v2144 = vadd.f32 %v1929, %v2143
        %2145 = vmatprep.mubr.f32.mxu0 %v953
        %2146 = vmatmul.mubr.f32.gmra.mrb[0].mxu0 %v952
        %v2147 = vpop.f32.mrb[0].mxu0
        %v2148 = vadd.f32 %v1933, %v2147
        %v2149 = vpop.f32.mrb[0].mxu0
        %v2150 = vadd.f32 %v1935, %v2149
        %2151 = vmatprep.mubr.f32.mxu0 %v957
        %2152 = vmatmul.mubr.f32.gmra.mrb[0].mxu0 %v956
        %v2153 = vpop.f32.mrb[0].mxu0
        %v2154 = vadd.f32 %v1939, %v2153
        %v2155 = vpop.f32.mrb[0].mxu0
        %v2156 = vadd.f32 %v1941, %v2155
        %2157 = vmatprep.mubr.f32.mxu0 %v961
        %2158 = vmatmul.mubr.f32.gmra.mrb[0].mxu0 %v960
        %v2159 = vpop.f32.mrb[0].mxu0
        %v2160 = vadd.f32 %v1945, %v2159
        %v2161 = vpop.f32.mrb[0].mxu0
        %v2162 = vadd.f32 %v1947, %v2161
        %2163 = vmatprep.mubr.f32.mxu0 %v965
        %2164 = vmatmul.mubr.f32.gmra.mrb[0].mxu0 %v964
        %v2165 = vpop.f32.mrb[0].mxu0
        %v2166 = vadd.f32 %v1951, %v2165
        %v2167 = vpop.f32.mrb[0].mxu0
        %v2168 = vadd.f32 %v1953, %v2167
        %2169 = vmatprep.mubr.f32.mxu0 %v969
        %2170 = vmatmul.mubr.f32.gmra.mrb[0].mxu0 %v968
        %v2171 = vpop.f32.mrb[0].mxu0
        %v2172 = vadd.f32 %v1957, %v2171
        %v2173 = vpop.f32.mrb[0].mxu0
        %v2174 = vadd.f32 %v1959, %v2173
        %2175 = vmatprep.mubr.f32.mxu0 %v973
        %2176 = vmatmul.mubr.f32.gmra.mrb[0].mxu0 %v972
        %v2177 = vpop.f32.mrb[0].mxu0
        %v2178 = vadd.f32 %v1963, %v2177
        %v2179 = vpop.f32.mrb[0].mxu0
        %v2180 = vadd.f32 %v1965, %v2179
        %2181 = vmatprep.mubr.f32.mxu0 %v977
        %2182 = vmatmul.mubr.f32.gmra.mrb[0].mxu0 %v976
        %v2183 = vpop.f32.mrb[0].mxu0
        %v2184 = vadd.f32 %v1969, %v2183
        %v2185 = vpop.f32.mrb[0].mxu0
        %v2186 = vadd.f32 %v1971, %v2185
        %2187 = vmatprep.mubr.f32.mxu0 %v981
        %2188 = vmatmul.mubr.f32.gmra.mrb[0].mxu0 %v980
        %v2189 = vpop.f32.mrb[0].mxu0
        %v2190 = vadd.f32 %v1975, %v2189
        %v2191 = vpop.f32.mrb[0].mxu0
        %v2192 = vadd.f32 %v1977, %v2191
        %2193 = vmatprep.mubr.f32.mxu0 %v985
        %2194 = vmatmul.mubr.f32.gmra.mrb[0].mxu0 %v984
        %v2195 = vpop.f32.mrb[0].mxu0
        %v2196 = vadd.f32 %v1981, %v2195
        %v2197 = vpop.f32.mrb[0].mxu0
        %v2198 = vadd.f32 %v1983, %v2197
        %2199 = vmatprep.mubr.f32.mxu0 %v989
        %2200 = vmatmul.mubr.f32.gmra.mrb[0].mxu0 %v988
        %v2201 = vpop.f32.mrb[0].mxu0
        %v2202 = vadd.f32 %v1987, %v2201
        %v2203 = vpop.f32.mrb[0].mxu0
        %v2204 = vadd.f32 %v1989, %v2203
        %2205 = vdwg.mxu0
        %v2206 = vadd.f32 %v1246, %v1628
        %v2207 = vadd.f32 %v1247, %v1630
        %v2208 = vadd.f32 %v1248, %v2058
        %v2209 = vadd.f32 %v1249, %v2060
        %v2210 = vadd.f32 %v1250, %v1634
        %v2211 = vadd.f32 %v1251, %v1636
        %v2212 = vadd.f32 %v1252, %v2064
        %v2213 = vadd.f32 %v1253, %v2066
        %v2214 = vadd.f32 %v1254, %v1640
        %v2215 = vadd.f32 %v1255, %v1642
        %v2216 = vadd.f32 %v1256, %v2070
        %v2217 = vadd.f32 %v1257, %v2072
        %v2218 = vadd.f32 %v1258, %v1646
        %v2219 = vadd.f32 %v1259, %v1648
        %v2220 = vadd.f32 %v1260, %v2076
        %v2221 = vadd.f32 %v1261, %v2078
        %v2222 = vadd.f32 %v1262, %v1652
        %v2223 = vadd.f32 %v1263, %v1654
        %v2224 = vadd.f32 %v1264, %v2082
        %v2225 = vadd.f32 %v1265, %v2084
        %v2226 = vadd.f32 %v1266, %v1658
        %v2227 = vadd.f32 %v1267, %v1660
        %v2228 = vadd.f32 %v1268, %v2088
        %v2229 = vadd.f32 %v1269, %v2090
        %v2230 = vadd.f32 %v1270, %v1664
        %v2231 = vadd.f32 %v1271, %v1666
        %v2232 = vadd.f32 %v1272, %v2094
        %v2233 = vadd.f32 %v1273, %v2096
        %v2234 = vadd.f32 %v1274, %v1670
        %v2235 = vadd.f32 %v1275, %v1672
        %v2236 = vadd.f32 %v1276, %v2100
        %v2237 = vadd.f32 %v1277, %v2102
        %v2238 = vadd.f32 %v1278, %v1676
        %v2239 = vadd.f32 %v1279, %v1678
        %v2240 = vadd.f32 %v1280, %v2106
        %v2241 = vadd.f32 %v1281, %v2108
        %v2242 = vadd.f32 %v1282, %v1682
        %v2243 = vadd.f32 %v1283, %v1684
        %v2244 = vadd.f32 %v1284, %v2112
        %v2245 = vadd.f32 %v1285, %v2114
        %v2246 = vadd.f32 %v1286, %v1688
        %v2247 = vadd.f32 %v1287, %v1690
        %v2248 = vadd.f32 %v1288, %v2118
        %v2249 = vadd.f32 %v1289, %v2120
        %v2250 = vadd.f32 %v1290, %v1694
        %v2251 = vadd.f32 %v1291, %v1696
        %v2252 = vadd.f32 %v1292, %v2124
        %v2253 = vadd.f32 %v1293, %v2126
        %v2254 = vadd.f32 %v1294, %v1700
        %v2255 = vadd.f32 %v1295, %v1702
        %v2256 = vadd.f32 %v1296, %v2130
        %v2257 = vadd.f32 %v1297, %v2132
        %v2258 = vadd.f32 %v1298, %v1706
        %v2259 = vadd.f32 %v1299, %v1708
        %v2260 = vadd.f32 %v1300, %v2136
        %v2261 = vadd.f32 %v1301, %v2138
        %v2262 = vadd.f32 %v1302, %v1712
        %v2263 = vadd.f32 %v1303, %v1714
        %v2264 = vadd.f32 %v1304, %v2142
        %v2265 = vadd.f32 %v1305, %v2144
        %v2266 = vadd.f32 %v1306, %v1718
        %v2267 = vadd.f32 %v1307, %v1720
        %v2268 = vadd.f32 %v1308, %v2148
        %v2269 = vadd.f32 %v1309, %v2150
        %v2270 = vadd.f32 %v1310, %v1724
        %v2271 = vadd.f32 %v1311, %v1726
        %v2272 = vadd.f32 %v1312, %v2154
        %v2273 = vadd.f32 %v1313, %v2156
        %v2274 = vadd.f32 %v1314, %v1730
        %v2275 = vadd.f32 %v1315, %v1732
        %v2276 = vadd.f32 %v1316, %v2160
        %v2277 = vadd.f32 %v1317, %v2162
        %v2278 = vadd.f32 %v1318, %v1736
        %v2279 = vadd.f32 %v1319, %v1738
        %v2280 = vadd.f32 %v1320, %v2166
        %v2281 = vadd.f32 %v1321, %v2168
        %v2282 = vadd.f32 %v1322, %v1742
        %v2283 = vadd.f32 %v1323, %v1744
        %v2284 = vadd.f32 %v1324, %v2172
        %v2285 = vadd.f32 %v1325, %v2174
        %v2286 = vadd.f32 %v1326, %v1748
        %v2287 = vadd.f32 %v1327, %v1750
        %v2288 = vadd.f32 %v1328, %v2178
        %v2289 = vadd.f32 %v1329, %v2180
        %v2290 = vadd.f32 %v1330, %v1754
        %v2291 = vadd.f32 %v1331, %v1756
        %v2292 = vadd.f32 %v1332, %v2184
        %v2293 = vadd.f32 %v1333, %v2186
        %v2294 = vadd.f32 %v1334, %v1760
        %v2295 = vadd.f32 %v1335, %v1762
        %v2296 = vadd.f32 %v1336, %v2190
        %v2297 = vadd.f32 %v1337, %v2192
        %v2298 = vadd.f32 %v1338, %v1766
        %v2299 = vadd.f32 %v1339, %v1768
        %v2300 = vadd.f32 %v1340, %v2196
        %v2301 = vadd.f32 %v1341, %v2198
        %v2302 = vadd.f32 %v1342, %v1772
        %v2303 = vadd.f32 %v1343, %v1774
        %v2304 = vadd.f32 %v1344, %v2202
        %v2305 = vadd.f32 %v1345, %v2204
        %2306 = vst [vmem:[#allocation2] sm:$0xff] %v2206
        %2307 = vst [vmem:[#allocation2 + $0x8] sm:$0xff] %v2207
        %2308 = vst [vmem:[#allocation2 + $0x10] sm:$0xff] %v2208
        %2309 = vst [vmem:[#allocation2 + $0x18] sm:$0xff] %v2209
        %2310 = vst [vmem:[#allocation2 + $0x20] sm:$0xff] %v2210
        %2311 = vst [vmem:[#allocation2 + $0x28] sm:$0xff] %v2211
        %2312 = vst [vmem:[#allocation2 + $0x30] sm:$0xff] %v2212
        %2313 = vst [vmem:[#allocation2 + $0x38] sm:$0xff] %v2213
        %2314 = vst [vmem:[#allocation2 + $0x40] sm:$0xff] %v2214
        %2315 = vst [vmem:[#allocation2 + $0x48] sm:$0xff] %v2215
        %2316 = vst [vmem:[#allocation2 + $0x50] sm:$0xff] %v2216
        %2317 = vst [vmem:[#allocation2 + $0x58] sm:$0xff] %v2217
        %2318 = vst [vmem:[#allocation2 + $0x60] sm:$0xff] %v2218
        %2319 = vst [vmem:[#allocation2 + $0x68] sm:$0xff] %v2219
        %2320 = vst [vmem:[#allocation2 + $0x70] sm:$0xff] %v2220
        %2321 = vst [vmem:[#allocation2 + $0x78] sm:$0xff] %v2221
        %2322 = vst [vmem:[#allocation2 + $0x80] sm:$0xff] %v2222
        %2323 = vst [vmem:[#allocation2 + $0x88] sm:$0xff] %v2223
        %2324 = vst [vmem:[#allocation2 + $0x90] sm:$0xff] %v2224
        %2325 = vst [vmem:[#allocation2 + $0x98] sm:$0xff] %v2225
        %2326 = vst [vmem:[#allocation2 + $0xa0] sm:$0xff] %v2226
        %2327 = vst [vmem:[#allocation2 + $0xa8] sm:$0xff] %v2227
        %2328 = vst [vmem:[#allocation2 + $0xb0] sm:$0xff] %v2228
        %2329 = vst [vmem:[#allocation2 + $0xb8] sm:$0xff] %v2229
        %2330 = vst [vmem:[#allocation2 + $0xc0] sm:$0xff] %v2230
        %2331 = vst [vmem:[#allocation2 + $0xc8] sm:$0xff] %v2231
        %2332 = vst [vmem:[#allocation2 + $0xd0] sm:$0xff] %v2232
        %2333 = vst [vmem:[#allocation2 + $0xd8] sm:$0xff] %v2233
        %2334 = vst [vmem:[#allocation2 + $0xe0] sm:$0xff] %v2234
        %2335 = vst [vmem:[#allocation2 + $0xe8] sm:$0xff] %v2235
        %2336 = vst [vmem:[#allocation2 + $0xf0] sm:$0xff] %v2236
        %2337 = vst [vmem:[#allocation2 + $0xf8] sm:$0xff] %v2237
        %2338 = vst [vmem:[#allocation2 + $0x100] sm:$0xff] %v2238
        %2339 = vst [vmem:[#allocation2 + $0x108] sm:$0xff] %v2239
        %2340 = vst [vmem:[#allocation2 + $0x110] sm:$0xff] %v2240
        %2341 = vst [vmem:[#allocation2 + $0x118] sm:$0xff] %v2241
        %2342 = vst [vmem:[#allocation2 + $0x120] sm:$0xff] %v2242
        %2343 = vst [vmem:[#allocation2 + $0x128] sm:$0xff] %v2243
        %2344 = vst [vmem:[#allocation2 + $0x130] sm:$0xff] %v2244
        %2345 = vst [vmem:[#allocation2 + $0x138] sm:$0xff] %v2245
        %2346 = vst [vmem:[#allocation2 + $0x140] sm:$0xff] %v2246
        %2347 = vst [vmem:[#allocation2 + $0x148] sm:$0xff] %v2247
        %2348 = vst [vmem:[#allocation2 + $0x150] sm:$0xff] %v2248
        %2349 = vst [vmem:[#allocation2 + $0x158] sm:$0xff] %v2249
        %2350 = vst [vmem:[#allocation2 + $0x160] sm:$0xff] %v2250
        %2351 = vst [vmem:[#allocation2 + $0x168] sm:$0xff] %v2251
        %2352 = vst [vmem:[#allocation2 + $0x170] sm:$0xff] %v2252
        %2353 = vst [vmem:[#allocation2 + $0x178] sm:$0xff] %v2253
        %2354 = vst [vmem:[#allocation2 + $0x180] sm:$0xff] %v2254
        %2355 = vst [vmem:[#allocation2 + $0x188] sm:$0xff] %v2255
        %2356 = vst [vmem:[#allocation2 + $0x190] sm:$0xff] %v2256
        %2357 = vst [vmem:[#allocation2 + $0x198] sm:$0xff] %v2257
        %2358 = vst [vmem:[#allocation2 + $0x1a0] sm:$0xff] %v2258
        %2359 = vst [vmem:[#allocation2 + $0x1a8] sm:$0xff] %v2259
        %2360 = vst [vmem:[#allocation2 + $0x1b0] sm:$0xff] %v2260
        %2361 = vst [vmem:[#allocation2 + $0x1b8] sm:$0xff] %v2261
        %2362 = vst [vmem:[#allocation2 + $0x1c0] sm:$0xff] %v2262
        %2363 = vst [vmem:[#allocation2 + $0x1c8] sm:$0xff] %v2263
        %2364 = vst [vmem:[#allocation2 + $0x1d0] sm:$0xff] %v2264
        %2365 = vst [vmem:[#allocation2 + $0x1d8] sm:$0xff] %v2265
        %2366 = vst [vmem:[#allocation2 + $0x1e0] sm:$0xff] %v2266
        %2367 = vst [vmem:[#allocation2 + $0x1e8] sm:$0xff] %v2267
        %2368 = vst [vmem:[#allocation2 + $0x1f0] sm:$0xff] %v2268
        %2369 = vst [vmem:[#allocation2 + $0x1f8] sm:$0xff] %v2269
        %2370 = vst [vmem:[#allocation2 + $0x200] sm:$0xff] %v2270
        %2371 = vst [vmem:[#allocation2 + $0x208] sm:$0xff] %v2271
        %2372 = vst [vmem:[#allocation2 + $0x210] sm:$0xff] %v2272
        %2373 = vst [vmem:[#allocation2 + $0x218] sm:$0xff] %v2273
        %2374 = vst [vmem:[#allocation2 + $0x220] sm:$0xff] %v2274
        %2375 = vst [vmem:[#allocation2 + $0x228] sm:$0xff] %v2275
        %2376 = vst [vmem:[#allocation2 + $0x230] sm:$0xff] %v2276
        %2377 = vst [vmem:[#allocation2 + $0x238] sm:$0xff] %v2277
        %2378 = vst [vmem:[#allocation2 + $0x240] sm:$0xff] %v2278
        %2379 = vst [vmem:[#allocation2 + $0x248] sm:$0xff] %v2279
        %2380 = vst [vmem:[#allocation2 + $0x250] sm:$0xff] %v2280
        %2381 = vst [vmem:[#allocation2 + $0x258] sm:$0xff] %v2281
        %2382 = vst [vmem:[#allocation2 + $0x260] sm:$0xff] %v2282
        %2383 = vst [vmem:[#allocation2 + $0x268] sm:$0xff] %v2283
        %2384 = vst [vmem:[#allocation2 + $0x270] sm:$0xff] %v2284
        %2385 = vst [vmem:[#allocation2 + $0x278] sm:$0xff] %v2285
        %2386 = vst [vmem:[#allocation2 + $0x280] sm:$0xff] %v2286
        %2387 = vst [vmem:[#allocation2 + $0x288] sm:$0xff] %v2287
        %2388 = vst [vmem:[#allocation2 + $0x290] sm:$0xff] %v2288
        %2389 = vst [vmem:[#allocation2 + $0x298] sm:$0xff] %v2289
        %2390 = vst [vmem:[#allocation2 + $0x2a0] sm:$0xff] %v2290
        %2391 = vst [vmem:[#allocation2 + $0x2a8] sm:$0xff] %v2291
        %2392 = vst [vmem:[#allocation2 + $0x2b0] sm:$0xff] %v2292
        %2393 = vst [vmem:[#allocation2 + $0x2b8] sm:$0xff] %v2293
        %2394 = vst [vmem:[#allocation2 + $0x2c0] sm:$0xff] %v2294
        %2395 = vst [vmem:[#allocation2 + $0x2c8] sm:$0xff] %v2295
        %2396 = vst [vmem:[#allocation2 + $0x2d0] sm:$0xff] %v2296
        %2397 = vst [vmem:[#allocation2 + $0x2d8] sm:$0xff] %v2297
        %2398 = vst [vmem:[#allocation2 + $0x2e0] sm:$0xff] %v2298
        %2399 = vst [vmem:[#allocation2 + $0x2e8] sm:$0xff] %v2299
        %2400 = vst [vmem:[#allocation2 + $0x2f0] sm:$0xff] %v2300
        %2401 = vst [vmem:[#allocation2 + $0x2f8] sm:$0xff] %v2301
        %2402 = vst [vmem:[#allocation2 + $0x300] sm:$0xf] %v2302
        %2403 = vst [vmem:[#allocation2 + $0x308] sm:$0xf] %v2303
        %2404 = vst [vmem:[#allocation2 + $0x310] sm:$0xf] %v2304
        %2405 = vst [vmem:[#allocation2 + $0x318] sm:$0xf] %v2305
        %p2406 = scmp.eq.s32.totalorder %s26, 3
        // Predicated region
        $region49: #{_gelu_linear_2d.1} parent=31 // pred_check
          %p2407 = pneg %p2406
        $region50: #{_gelu_linear_2d.1} parent=31 // pred_check_branch
          %2409 = sbr.rel (%p2407) target = $region52
        $region51: #{_gelu_linear_2d.1} parent=31 // pred_region
          %v2410 = vld [vmem:[#allocation2] sm:$0xff]
          %v2411 = vld [vmem:[#allocation2 + $0x8] sm:$0xff]
          %v2412 = vld [vmem:[#allocation2 + $0x10] sm:$0xff]
          %v2413 = vld [vmem:[#allocation2 + $0x18] sm:$0xff]
          %v2414 = vld [vmem:[#allocation2 + $0x20] sm:$0xff]
          %v2415 = vld [vmem:[#allocation2 + $0x28] sm:$0xff]
          %v2416 = vld [vmem:[#allocation2 + $0x30] sm:$0xff]
          %v2417 = vld [vmem:[#allocation2 + $0x38] sm:$0xff]
          %v2418 = vld [vmem:[#allocation2 + $0x40] sm:$0xff]
          %v2419 = vld [vmem:[#allocation2 + $0x48] sm:$0xff]
          %v2420 = vld [vmem:[#allocation2 + $0x50] sm:$0xff]
          %v2421 = vld [vmem:[#allocation2 + $0x58] sm:$0xff]
          %v2422 = vld [vmem:[#allocation2 + $0x60] sm:$0xff]
          %v2423 = vld [vmem:[#allocation2 + $0x68] sm:$0xff]
          %v2424 = vld [vmem:[#allocation2 + $0x70] sm:$0xff]
          %v2425 = vld [vmem:[#allocation2 + $0x78] sm:$0xff]
          %v2426 = vld [vmem:[#allocation2 + $0x80] sm:$0xff]
          %v2427 = vld [vmem:[#allocation2 + $0x88] sm:$0xff]
          %v2428 = vld [vmem:[#allocation2 + $0x90] sm:$0xff]
          %v2429 = vld [vmem:[#allocation2 + $0x98] sm:$0xff]
          %v2430 = vld [vmem:[#allocation2 + $0xa0] sm:$0xff]
          %v2431 = vld [vmem:[#allocation2 + $0xa8] sm:$0xff]
          %v2432 = vld [vmem:[#allocation2 + $0xb0] sm:$0xff]
          %v2433 = vld [vmem:[#allocation2 + $0xb8] sm:$0xff]
          %v2434 = vld [vmem:[#allocation2 + $0xc0] sm:$0xff]
          %v2435 = vld [vmem:[#allocation2 + $0xc8] sm:$0xff]
          %v2436 = vld [vmem:[#allocation2 + $0xd0] sm:$0xff]
          %v2437 = vld [vmem:[#allocation2 + $0xd8] sm:$0xff]
          %v2438 = vld [vmem:[#allocation2 + $0xe0] sm:$0xff]
          %v2439 = vld [vmem:[#allocation2 + $0xe8] sm:$0xff]
          %v2440 = vld [vmem:[#allocation2 + $0xf0] sm:$0xff]
          %v2441 = vld [vmem:[#allocation2 + $0xf8] sm:$0xff]
          %v2442 = vld [vmem:[#allocation2 + $0x100] sm:$0xff]
          %v2443 = vld [vmem:[#allocation2 + $0x108] sm:$0xff]
          %v2444 = vld [vmem:[#allocation2 + $0x110] sm:$0xff]
          %v2445 = vld [vmem:[#allocation2 + $0x118] sm:$0xff]
          %v2446 = vld [vmem:[#allocation2 + $0x120] sm:$0xff]
          %v2447 = vld [vmem:[#allocation2 + $0x128] sm:$0xff]
          %v2448 = vld [vmem:[#allocation2 + $0x130] sm:$0xff]
          %v2449 = vld [vmem:[#allocation2 + $0x138] sm:$0xff]
          %v2450 = vld [vmem:[#allocation2 + $0x140] sm:$0xff]
          %v2451 = vld [vmem:[#allocation2 + $0x148] sm:$0xff]
          %v2452 = vld [vmem:[#allocation2 + $0x150] sm:$0xff]
          %v2453 = vld [vmem:[#allocation2 + $0x158] sm:$0xff]
          %v2454 = vld [vmem:[#allocation2 + $0x160] sm:$0xff]
          %v2455 = vld [vmem:[#allocation2 + $0x168] sm:$0xff]
          %v2456 = vld [vmem:[#allocation2 + $0x170] sm:$0xff]
          %v2457 = vld [vmem:[#allocation2 + $0x178] sm:$0xff]
          %v2458 = vld [vmem:[#allocation2 + $0x180] sm:$0xff]
          %v2459 = vld [vmem:[#allocation2 + $0x188] sm:$0xff]
          %v2460 = vld [vmem:[#allocation2 + $0x190] sm:$0xff]
          %v2461 = vld [vmem:[#allocation2 + $0x198] sm:$0xff]
          %v2462 = vld [vmem:[#allocation2 + $0x1a0] sm:$0xff]
          %v2463 = vld [vmem:[#allocation2 + $0x1a8] sm:$0xff]
          %v2464 = vld [vmem:[#allocation2 + $0x1b0] sm:$0xff]
          %v2465 = vld [vmem:[#allocation2 + $0x1b8] sm:$0xff]
          %v2466 = vld [vmem:[#allocation2 + $0x1c0] sm:$0xff]
          %v2467 = vld [vmem:[#allocation2 + $0x1c8] sm:$0xff]
          %v2468 = vld [vmem:[#allocation2 + $0x1d0] sm:$0xff]
          %v2469 = vld [vmem:[#allocation2 + $0x1d8] sm:$0xff]
          %v2470 = vld [vmem:[#allocation2 + $0x1e0] sm:$0xff]
          %v2471 = vld [vmem:[#allocation2 + $0x1e8] sm:$0xff]
          %v2472 = vld [vmem:[#allocation2 + $0x1f0] sm:$0xff]
          %v2473 = vld [vmem:[#allocation2 + $0x1f8] sm:$0xff]
          %v2474 = vld [vmem:[#allocation2 + $0x200] sm:$0xff]
          %v2475 = vld [vmem:[#allocation2 + $0x208] sm:$0xff]
          %v2476 = vld [vmem:[#allocation2 + $0x210] sm:$0xff]
          %v2477 = vld [vmem:[#allocation2 + $0x218] sm:$0xff]
          %v2478 = vld [vmem:[#allocation2 + $0x220] sm:$0xff]
          %v2479 = vld [vmem:[#allocation2 + $0x228] sm:$0xff]
          %v2480 = vld [vmem:[#allocation2 + $0x230] sm:$0xff]
          %v2481 = vld [vmem:[#allocation2 + $0x238] sm:$0xff]
          %v2482 = vld [vmem:[#allocation2 + $0x240] sm:$0xff]
          %v2483 = vld [vmem:[#allocation2 + $0x248] sm:$0xff]
          %v2484 = vld [vmem:[#allocation2 + $0x250] sm:$0xff]
          %v2485 = vld [vmem:[#allocation2 + $0x258] sm:$0xff]
          %v2486 = vld [vmem:[#allocation2 + $0x260] sm:$0xff]
          %v2487 = vld [vmem:[#allocation2 + $0x268] sm:$0xff]
          %v2488 = vld [vmem:[#allocation2 + $0x270] sm:$0xff]
          %v2489 = vld [vmem:[#allocation2 + $0x278] sm:$0xff]
          %v2490 = vld [vmem:[#allocation2 + $0x280] sm:$0xff]
          %v2491 = vld [vmem:[#allocation2 + $0x288] sm:$0xff]
          %v2492 = vld [vmem:[#allocation2 + $0x290] sm:$0xff]
          %v2493 = vld [vmem:[#allocation2 + $0x298] sm:$0xff]
          %v2494 = vld [vmem:[#allocation2 + $0x2a0] sm:$0xff]
          %v2495 = vld [vmem:[#allocation2 + $0x2a8] sm:$0xff]
          %v2496 = vld [vmem:[#allocation2 + $0x2b0] sm:$0xff]
          %v2497 = vld [vmem:[#allocation2 + $0x2b8] sm:$0xff]
          %v2498 = vld [vmem:[#allocation2 + $0x2c0] sm:$0xff]
          %v2499 = vld [vmem:[#allocation2 + $0x2c8] sm:$0xff]
          %v2500 = vld [vmem:[#allocation2 + $0x2d0] sm:$0xff]
          %v2501 = vld [vmem:[#allocation2 + $0x2d8] sm:$0xff]
          %v2502 = vld [vmem:[#allocation2 + $0x2e0] sm:$0xff]
          %v2503 = vld [vmem:[#allocation2 + $0x2e8] sm:$0xff]
          %v2504 = vld [vmem:[#allocation2 + $0x2f0] sm:$0xff]
          %v2505 = vld [vmem:[#allocation2 + $0x2f8] sm:$0xff]
          %v2506 = vld [vmem:[#allocation2 + $0x300] sm:$0xf]
          %v2507 = vld [vmem:[#allocation2 + $0x308] sm:$0xf]
          %v2508 = vld [vmem:[#allocation2 + $0x310] sm:$0xf]
          %v2509 = vld [vmem:[#allocation2 + $0x318] sm:$0xf]
          %2510 = vst [vmem:[#allocation9] sm:$0xff] %v2410
          %2511 = vst [vmem:[#allocation9 + $0x8] sm:$0xff] %v2411
          %2512 = vst [vmem:[#allocation9 + $0x10] sm:$0xff] %v2412
          %2513 = vst [vmem:[#allocation9 + $0x18] sm:$0xff] %v2413
          %2514 = vst [vmem:[#allocation9 + $0x20] sm:$0xff] %v2414
          %2515 = vst [vmem:[#allocation9 + $0x28] sm:$0xff] %v2415
          %2516 = vst [vmem:[#allocation9 + $0x30] sm:$0xff] %v2416
          %2517 = vst [vmem:[#allocation9 + $0x38] sm:$0xff] %v2417
          %2518 = vst [vmem:[#allocation9 + $0x40] sm:$0xff] %v2418
          %2519 = vst [vmem:[#allocation9 + $0x48] sm:$0xff] %v2419
          %2520 = vst [vmem:[#allocation9 + $0x50] sm:$0xff] %v2420
          %2521 = vst [vmem:[#allocation9 + $0x58] sm:$0xff] %v2421
          %2522 = vst [vmem:[#allocation9 + $0x60] sm:$0xff] %v2422
          %2523 = vst [vmem:[#allocation9 + $0x68] sm:$0xff] %v2423
          %2524 = vst [vmem:[#allocation9 + $0x70] sm:$0xff] %v2424
          %2525 = vst [vmem:[#allocation9 + $0x78] sm:$0xff] %v2425
          %2526 = vst [vmem:[#allocation9 + $0x80] sm:$0xff] %v2426
          %2527 = vst [vmem:[#allocation9 + $0x88] sm:$0xff] %v2427
          %2528 = vst [vmem:[#allocation9 + $0x90] sm:$0xff] %v2428
          %2529 = vst [vmem:[#allocation9 + $0x98] sm:$0xff] %v2429
          %2530 = vst [vmem:[#allocation9 + $0xa0] sm:$0xff] %v2430
          %2531 = vst [vmem:[#allocation9 + $0xa8] sm:$0xff] %v2431
          %2532 = vst [vmem:[#allocation9 + $0xb0] sm:$0xff] %v2432
          %2533 = vst [vmem:[#allocation9 + $0xb8] sm:$0xff] %v2433
          %2534 = vst [vmem:[#allocation9 + $0xc0] sm:$0xff] %v2434
          %2535 = vst [vmem:[#allocation9 + $0xc8] sm:$0xff] %v2435
          %2536 = vst [vmem:[#allocation9 + $0xd0] sm:$0xff] %v2436
          %2537 = vst [vmem:[#allocation9 + $0xd8] sm:$0xff] %v2437
          %2538 = vst [vmem:[#allocation9 + $0xe0] sm:$0xff] %v2438
          %2539 = vst [vmem:[#allocation9 + $0xe8] sm:$0xff] %v2439
          %2540 = vst [vmem:[#allocation9 + $0xf0] sm:$0xff] %v2440
          %2541 = vst [vmem:[#allocation9 + $0xf8] sm:$0xff] %v2441
          %2542 = vst [vmem:[#allocation9 + $0x100] sm:$0xff] %v2442
          %2543 = vst [vmem:[#allocation9 + $0x108] sm:$0xff] %v2443
          %2544 = vst [vmem:[#allocation9 + $0x110] sm:$0xff] %v2444
          %2545 = vst [vmem:[#allocation9 + $0x118] sm:$0xff] %v2445
          %2546 = vst [vmem:[#allocation9 + $0x120] sm:$0xff] %v2446
          %2547 = vst [vmem:[#allocation9 + $0x128] sm:$0xff] %v2447
          %2548 = vst [vmem:[#allocation9 + $0x130] sm:$0xff] %v2448
          %2549 = vst [vmem:[#allocation9 + $0x138] sm:$0xff] %v2449
          %2550 = vst [vmem:[#allocation9 + $0x140] sm:$0xff] %v2450
          %2551 = vst [vmem:[#allocation9 + $0x148] sm:$0xff] %v2451
          %2552 = vst [vmem:[#allocation9 + $0x150] sm:$0xff] %v2452
          %2553 = vst [vmem:[#allocation9 + $0x158] sm:$0xff] %v2453
          %2554 = vst [vmem:[#allocation9 + $0x160] sm:$0xff] %v2454
          %2555 = vst [vmem:[#allocation9 + $0x168] sm:$0xff] %v2455
          %2556 = vst [vmem:[#allocation9 + $0x170] sm:$0xff] %v2456
          %2557 = vst [vmem:[#allocation9 + $0x178] sm:$0xff] %v2457
          %2558 = vst [vmem:[#allocation9 + $0x180] sm:$0xff] %v2458
          %2559 = vst [vmem:[#allocation9 + $0x188] sm:$0xff] %v2459
          %2560 = vst [vmem:[#allocation9 + $0x190] sm:$0xff] %v2460
          %2561 = vst [vmem:[#allocation9 + $0x198] sm:$0xff] %v2461
          %2562 = vst [vmem:[#allocation9 + $0x1a0] sm:$0xff] %v2462
          %2563 = vst [vmem:[#allocation9 + $0x1a8] sm:$0xff] %v2463
          %2564 = vst [vmem:[#allocation9 + $0x1b0] sm:$0xff] %v2464
          %2565 = vst [vmem:[#allocation9 + $0x1b8] sm:$0xff] %v2465
          %2566 = vst [vmem:[#allocation9 + $0x1c0] sm:$0xff] %v2466
          %2567 = vst [vmem:[#allocation9 + $0x1c8] sm:$0xff] %v2467
          %2568 = vst [vmem:[#allocation9 + $0x1d0] sm:$0xff] %v2468
          %2569 = vst [vmem:[#allocation9 + $0x1d8] sm:$0xff] %v2469
          %2570 = vst [vmem:[#allocation9 + $0x1e0] sm:$0xff] %v2470
          %2571 = vst [vmem:[#allocation9 + $0x1e8] sm:$0xff] %v2471
          %2572 = vst [vmem:[#allocation9 + $0x1f0] sm:$0xff] %v2472
          %2573 = vst [vmem:[#allocation9 + $0x1f8] sm:$0xff] %v2473
          %2574 = vst [vmem:[#allocation9 + $0x200] sm:$0xff] %v2474
          %2575 = vst [vmem:[#allocation9 + $0x208] sm:$0xff] %v2475
          %2576 = vst [vmem:[#allocation9 + $0x210] sm:$0xff] %v2476
          %2577 = vst [vmem:[#allocation9 + $0x218] sm:$0xff] %v2477
          %2578 = vst [vmem:[#allocation9 + $0x220] sm:$0xff] %v2478
          %2579 = vst [vmem:[#allocation9 + $0x228] sm:$0xff] %v2479
          %2580 = vst [vmem:[#allocation9 + $0x230] sm:$0xff] %v2480
          %2581 = vst [vmem:[#allocation9 + $0x238] sm:$0xff] %v2481
          %2582 = vst [vmem:[#allocation9 + $0x240] sm:$0xff] %v2482
          %2583 = vst [vmem:[#allocation9 + $0x248] sm:$0xff] %v2483
          %2584 = vst [vmem:[#allocation9 + $0x250] sm:$0xff] %v2484
          %2585 = vst [vmem:[#allocation9 + $0x258] sm:$0xff] %v2485
          %2586 = vst [vmem:[#allocation9 + $0x260] sm:$0xff] %v2486
          %2587 = vst [vmem:[#allocation9 + $0x268] sm:$0xff] %v2487
          %2588 = vst [vmem:[#allocation9 + $0x270] sm:$0xff] %v2488
          %2589 = vst [vmem:[#allocation9 + $0x278] sm:$0xff] %v2489
          %2590 = vst [vmem:[#allocation9 + $0x280] sm:$0xff] %v2490
          %2591 = vst [vmem:[#allocation9 + $0x288] sm:$0xff] %v2491
          %2592 = vst [vmem:[#allocation9 + $0x290] sm:$0xff] %v2492
          %2593 = vst [vmem:[#allocation9 + $0x298] sm:$0xff] %v2493
          %2594 = vst [vmem:[#allocation9 + $0x2a0] sm:$0xff] %v2494
          %2595 = vst [vmem:[#allocation9 + $0x2a8] sm:$0xff] %v2495
          %2596 = vst [vmem:[#allocation9 + $0x2b0] sm:$0xff] %v2496
          %2597 = vst [vmem:[#allocation9 + $0x2b8] sm:$0xff] %v2497
          %2598 = vst [vmem:[#allocation9 + $0x2c0] sm:$0xff] %v2498
          %2599 = vst [vmem:[#allocation9 + $0x2c8] sm:$0xff] %v2499
          %2600 = vst [vmem:[#allocation9 + $0x2d0] sm:$0xff] %v2500
          %2601 = vst [vmem:[#allocation9 + $0x2d8] sm:$0xff] %v2501
          %2602 = vst [vmem:[#allocation9 + $0x2e0] sm:$0xff] %v2502
          %2603 = vst [vmem:[#allocation9 + $0x2e8] sm:$0xff] %v2503
          %2604 = vst [vmem:[#allocation9 + $0x2f0] sm:$0xff] %v2504
          %2605 = vst [vmem:[#allocation9 + $0x2f8] sm:$0xff] %v2505
          %2606 = vst [vmem:[#allocation9 + $0x300] sm:$0xf] %v2506
          %2607 = vst [vmem:[#allocation9 + $0x308] sm:$0xf] %v2507
          %2608 = vst [vmem:[#allocation9 + $0x310] sm:$0xf] %v2508
          %2609 = vst [vmem:[#allocation9 + $0x318] sm:$0xf] %v2509
        $region52: #{_gelu_linear_2d.1} parent=31 // pred_fallthru
          _
        // Predicated region
        $region53: #{_gelu_linear_2d.1} parent=31 // pred_check
          %p2610 = pneg %p131
        $region54: #{_gelu_linear_2d.1} parent=31 // pred_check_branch
          %2612 = sbr.rel (%p2610) target = $region56
        $region55: #{_gelu_linear_2d.1} parent=31 // pred_region
          %s2613 = smul.u32 4, %s25
          %s2615 = ssub.s32 12800, 12800
          %2616 = vsyncadd [#allocation5], %s2615
          %s2617 = smul.addr %s2613, 128
          %s2618 = scalar_lea.hbm %s3, %s2617
          %s2619 = sshll.u32 [#allocation9], 4
          %s2620 = int_to_ptr.vmem [resolvable:$true] %s2619
          %2625 = dma.vmem_to_hbm [thread:$0]  %s2620, 12800, %s2618, [#allocation5], 512, 512, 32
        $region56: #{_gelu_linear_2d.1} parent=31 // pred_fallthru
          _
        // Predicated region
        $region57: #{_gelu_linear_2d.1} parent=31 // pred_check
          %p2626 = pneg %p131
        $region58: #{_gelu_linear_2d.1} parent=31 // pred_check_branch
          %2628 = sbr.rel (%p2626) target = $region60
        $region59: #{_gelu_linear_2d.1} parent=31 // pred_region
          %2629 = dma.done [#allocation5], 12800
        $region60: #{_gelu_linear_2d.1} parent=31 // pred_fallthru
          _
      $region32: #{_gelu_linear_2d.1} parent=5 // pred_fallthru
        _
      %p2630 = scmp.le.s32.totalorder 2, %s16
      // Predicated region
      $region61: #{_gelu_linear_2d.1} parent=5 // pred_check
        %p2631 = pneg %p2630
      $region62: #{_gelu_linear_2d.1} parent=5 // pred_check_branch
        %2633 = sbr.rel (%p2631) target = $region64
      $region63: #{_gelu_linear_2d.1} parent=5 // pred_region
        %s2634 = ssub.s32 %s16, 2
      $region64: #{_gelu_linear_2d.1} parent=5 // pred_fallthru
        _
    $region6: #{_gelu_linear_2d.1} parent=1 // loop_footer
      %s20 = sadd.s32 1, %s16
    $region7: #{_gelu_linear_2d.1} parent=1 // loop_footer_branch
      %15 = sbr.rel target = $region3
    $region8: #{_gelu_linear_2d.1} parent=1 // loop_exit
      _
    %2635 = vsyncpa [#allocation4], 1
    %s2636 = scalar_lea.sflag [#allocation4], 1
    %2637 = vsyncpa %s2636, 1
    %2638 = vsyncpa [#allocation7], 1
    %s2639 = scalar_lea.sflag [#allocation7], 1
    %2640 = vsyncpa %s2639, 1
    %2641 = vsyncpa [#allocation5], 1
    %s2642 = scalar_lea.sflag [#allocation5], 1
    %2643 = vsyncpa %s2642, 1

</llo_original>
